<compile_context>
chip_gen: v5e
topology: v5e:2x2
jax: 0.10.0
libtpu: 0.0.40
codegen_flags: <defaults>
</compile_context>

<pallas_src>
import math

import jax
import jax.numpy as jnp
from jax.experimental import pallas as pl
from jax.experimental.pallas import tpu as pltpu


# ----------------------------------------------------------------------------
# Pallas kernels
# ----------------------------------------------------------------------------
def _conv_bias_stats_kernel(p_ref, w_ref, b_ref, y_ref, sum_ref, ssq_ref):
    """Fused 3x3 conv (as one matmul) + bias + per-batch BN partial stats.

    p_ref : (1, K, N)   im2col patches (bf16), K = Cin*9, N = H*W (lanes)
    w_ref : (Cout, K)   folded conv weight (bf16)
    b_ref : (Cout, 1)   bias (f32)
    y_ref : (1, Cout, N) conv output (f32, lane-dense)
    sum_ref / ssq_ref : (1, Cout, 1) per-batch partial sum / sum-of-squares
    """
    y = jnp.dot(w_ref[...], p_ref[0],
                preferred_element_type=jnp.float32) + b_ref[...]     # (Cout, N)
    y_ref[0] = y
    sum_ref[0] = jnp.sum(y, axis=-1, keepdims=True)                  # (Cout, 1)
    ssq_ref[0] = jnp.sum(y * y, axis=-1, keepdims=True)              # (Cout, 1)


def _bn_relu_kernel(y_ref, scale_ref, shift_ref, o_ref):
    """Fused BatchNorm (pre-folded scale/shift) + ReLU, lane-dense.

    y_ref : (1, Cout, N), scale/shift : (Cout, 1)
    """
    o_ref[0] = jnp.maximum(y_ref[0] * scale_ref[...] + shift_ref[...], 0.0)


# ----------------------------------------------------------------------------
# Pallas wrappers
# ----------------------------------------------------------------------------
def conv3x3_bn_relu(x, w, b, bn_scale, bn_shift, eps=1e-5):
    """Conv2d(3x3, pad=1) -> BatchNorm2d (training-mode batch stats) -> ReLU."""
    B, Cin, H, W = x.shape
    Cout = w.shape[0]
    N = H * W
    K = Cin * 9

    # im2col: (B, Cin*9, N), tap index ordered as c*9 + ky*3 + kx to match the
    # row-major reshape of the (Cout, Cin, 3, 3) weight.
    xp = jnp.pad(x, ((0, 0), (0, 0), (1, 1), (1, 1)))
    patches = jnp.stack(
        [xp[:, :, ky:ky + H, kx:kx + W] for ky in range(3) for kx in range(3)],
        axis=2)                                                       # (B, Cin, 9, H, W)
    patches = patches.reshape(B, K, N).astype(jnp.bfloat16)
    wm = w.reshape(Cout, K).astype(jnp.bfloat16)
    bm = b.reshape(Cout, 1).astype(jnp.float32)

    y, psum, pssq = pl.pallas_call(
        _conv_bias_stats_kernel,
        out_shape=(
            jax.ShapeDtypeStruct((B, Cout, N), jnp.float32),
            jax.ShapeDtypeStruct((B, Cout, 1), jnp.float32),
            jax.ShapeDtypeStruct((B, Cout, 1), jnp.float32),
        ),
        grid=(B,),
        in_specs=[
            pl.BlockSpec((1, K, N), lambda bb: (bb, 0, 0)),
            pl.BlockSpec((Cout, K), lambda bb: (0, 0)),
            pl.BlockSpec((Cout, 1), lambda bb: (0, 0)),
        ],
        out_specs=(
            pl.BlockSpec((1, Cout, N), lambda bb: (bb, 0, 0)),
            pl.BlockSpec((1, Cout, 1), lambda bb: (bb, 0, 0)),
            pl.BlockSpec((1, Cout, 1), lambda bb: (bb, 0, 0)),
        ),
        compiler_params=pltpu.CompilerParams(
            dimension_semantics=("parallel",),
            vmem_limit_bytes=64 * 1024 * 1024),
    )(patches, wm, bm)

    # Finalize training-mode BN statistics (biased variance) across B * N and
    # fold them with the affine params into a single per-channel scale/shift.
    n_tot = float(B * N)
    mean = jnp.sum(psum, axis=0)[:, 0] / n_tot                       # (Cout,)
    var = jnp.maximum(jnp.sum(pssq, axis=0)[:, 0] / n_tot - mean * mean, 0.0)
    scale = bn_scale / jnp.sqrt(var + eps)                           # (Cout,)
    shift = bn_shift - mean * scale                                  # (Cout,)

    out = pl.pallas_call(
        _bn_relu_kernel,
        out_shape=jax.ShapeDtypeStruct((B, Cout, N), jnp.float32),
        grid=(B,),
        in_specs=[
            pl.BlockSpec((1, Cout, N), lambda bb: (bb, 0, 0)),
            pl.BlockSpec((Cout, 1), lambda bb: (0, 0)),
            pl.BlockSpec((Cout, 1), lambda bb: (0, 0)),
        ],
        out_specs=pl.BlockSpec((1, Cout, N), lambda bb: (bb, 0, 0)),
        compiler_params=pltpu.CompilerParams(
            dimension_semantics=("parallel",),
            vmem_limit_bytes=64 * 1024 * 1024),
    )(y, scale.reshape(Cout, 1), shift.reshape(Cout, 1))
    return out.reshape(B, Cout, H, W)


# ----------------------------------------------------------------------------
# Plain-JAX glue: bilinear x2 upsample (PyTorch semantics, align_corners=False)
# ----------------------------------------------------------------------------
def bilinear_resize(x, out_h, out_w):
    B, C, H, W = x.shape
    scale_h = H / out_h
    scale_w = W / out_w

    def src(i, scale, size):
        s = (i + 0.5) * scale - 0.5
        s = jnp.maximum(s, 0.0)
        i0 = jnp.minimum(jnp.floor(s).astype(jnp.int32), size - 1)
        i1 = jnp.minimum(i0 + 1, size - 1)
        wgt = s - i0.astype(jnp.float32)
        return i0, i1, wgt

    h0, h1, wh = src(jnp.arange(out_h, dtype=jnp.float32), scale_h, H)
    w0, w1, ww = src(jnp.arange(out_w, dtype=jnp.float32), scale_w, W)
    top = x[:, :, h0, :]
    bot = x[:, :, h1, :]
    rows = top * (1.0 - wh)[None, None, :, None] + bot * wh[None, None, :, None]
    left = rows[:, :, :, w0]
    right = rows[:, :, :, w1]
    return left * (1.0 - ww)[None, None, None, :] + right * ww[None, None, None, :]


# ----------------------------------------------------------------------------
# DecoderBlock forward
# ----------------------------------------------------------------------------
def decoder_block_forward(params, x):
    x = bilinear_resize(x, x.shape[2] * 2, x.shape[3] * 2)
    x = conv3x3_bn_relu(x, params['conv1']['w'], params['conv1']['b'],
                        params['bn1']['scale'], params['bn1']['shift'])
    x = conv3x3_bn_relu(x, params['conv2']['w'], params['conv2']['b'],
                        params['bn2']['scale'], params['bn2']['shift'])
    return x


# Pure-JAX reference (for a correctness check against the Pallas path).
def decoder_block_reference(params, x, eps=1e-5):
    def conv(x, w, b):
        y = jax.lax.conv_general_dilated(
            x, w, window_strides=(1, 1), padding=[(1, 1), (1, 1)],
            dimension_numbers=('NCHW', 'OIHW', 'NCHW'))
        return y + b[None, :, None, None]

    def bn_relu(y, g, beta):
        mean = jnp.mean(y, axis=(0, 2, 3), keepdims=True)
        var = jnp.mean((y - mean) ** 2, axis=(0, 2, 3), keepdims=True)
        yh = (y - mean) / jnp.sqrt(var + eps)
        return jnp.maximum(yh * g[None, :, None, None] + beta[None, :, None, None], 0.0)

    x = bilinear_resize(x, x.shape[2] * 2, x.shape[3] * 2)
    x = bn_relu(conv(x, params['conv1']['w'], params['conv1']['b']),
                params['bn1']['scale'], params['bn1']['shift'])
    x = bn_relu(conv(x, params['conv2']['w'], params['conv2']['b']),
                params['bn2']['scale'], params['bn2']['shift'])
    return x


# ----------------------------------------------------------------------------
# Deterministic parameter initialization
# ----------------------------------------------------------------------------
def _conv_init(key, cout, cin, k):
    kw, kb = jax.random.split(key)
    fan_in = cin * k * k
    w = jax.random.normal(kw, (cout, cin, k, k), jnp.float32) / math.sqrt(fan_in)
    b = jax.random.normal(kb, (cout,), jnp.float32) * 0.01
    return {'w': w, 'b': b}


def _bn_init(key, c):
    ks, kb = jax.random.split(key)
    # Non-trivial affine params so the BN path is actually exercised.
    return {'scale': 1.0 + 0.1 * jax.random.normal(ks, (c,), jnp.float32),
            'shift': 0.1 * jax.random.normal(kb, (c,), jnp.float32)}


def init_decoder_block(key, cin, cout):
    k1, k2, k3, k4 = jax.random.split(key, 4)
    return {'conv1': _conv_init(k1, cout, cin, 3), 'bn1': _bn_init(k3, cout),
            'conv2': _conv_init(k2, cout, cout, 3), 'bn2': _bn_init(k4, cout)}


# ----------------------------------------------------------------------------
if __name__ == "__main__":
    B, Cin, Cout, H, W = 2, 8, 16, 16, 16
    key = jax.random.PRNGKey(0)
    kx, kp = jax.random.split(key)
    x = jax.random.normal(kx, (B, Cin, H, W), jnp.float32)
    params = init_decoder_block(kp, Cin, Cout)

    fwd = jax.jit(decoder_block_forward)
    out = jax.block_until_ready(fwd(params, x))
    ref = jax.block_until_ready(decoder_block_reference(params, x))

    assert out.shape == (B, Cout, 2 * H, 2 * W)
    assert bool(jnp.all(jnp.isfinite(out)))
    assert bool(jnp.all(out >= 0.0))                       # ReLU output
    # bf16 MXU operands -> loose tolerance vs the f32 reference.
    assert float(jnp.max(jnp.abs(out - ref))) < 0.25
    print("KERNEL_OK")
</pallas_src>

<mosaic_0001>
module attributes {stable_mosaic.version = 11 : i64} {
  func.func @_conv_bias_stats_kernel(%arg0: i32, %arg1: memref<1x72x1024xbf16, #tpu.memory_space<vmem>>, %arg2: memref<16x72xbf16, #tpu.memory_space<vmem>>, %arg3: memref<16x1xf32, #tpu.memory_space<vmem>>, %arg4: memref<1x16x1024xf32, #tpu.memory_space<vmem>>, %arg5: memref<1x16x1xf32, #tpu.memory_space<vmem>>, %arg6: memref<1x16x1xf32, #tpu.memory_space<vmem>>) attributes {dimension_semantics = [#tpu.dimension_semantics<parallel>], iteration_bounds = array<i64: 2>, scalar_prefetch = 0 : i64, scratch_operands = 0 : i64, tpu.core_type = #tpu.core_type<tc>, window_params = [{transform_indices = @transform_0, window_bounds = array<i64: 1, 72, 1024>}, {pipeline_mode = #tpu.pipeline_mode<synchronous>, transform_indices = @transform_1, window_bounds = array<i64: 16, 72>}, {pipeline_mode = #tpu.pipeline_mode<synchronous>, transform_indices = @transform_2, window_bounds = array<i64: 16, 1>}, {transform_indices = @transform_3, window_bounds = array<i64: 1, 16, 1024>}, {transform_indices = @transform_4, window_bounds = array<i64: 1, 16, 1>}, {transform_indices = @transform_5, window_bounds = array<i64: 1, 16, 1>}]} {
    %c0 = arith.constant 0 : index
    %c0_0 = arith.constant 0 : index
    %0 = vector.load %arg2[%c0, %c0_0] : memref<16x72xbf16, #tpu.memory_space<vmem>>, vector<16x72xbf16>
    %c0_1 = arith.constant 0 : index
    %c0_2 = arith.constant 0 : index
    %c0_3 = arith.constant 0 : index
    %1 = vector.load %arg1[%c0_1, %c0_2, %c0_3] : memref<1x72x1024xbf16, #tpu.memory_space<vmem>>, vector<1x72x1024xbf16>
    %2 = vector.shape_cast %1 : vector<1x72x1024xbf16> to vector<72x1024xbf16>
    %cst = arith.constant dense<0.000000e+00> : vector<16x1024xf32>
    %3 = tpu.matmul %0, %2, %cst {dimension_numbers = #tpu.dot_dimension_numbers<[1], [0], [0], [1], [0, 0, 1, 1], [], []>} : vector<16x72xbf16>, vector<72x1024xbf16>, vector<16x1024xf32> -> vector<16x1024xf32>
    %c0_4 = arith.constant 0 : index
    %c0_5 = arith.constant 0 : index
    %4 = vector.load %arg3[%c0_4, %c0_5] : memref<16x1xf32, #tpu.memory_space<vmem>>, vector<16x1xf32>
    %5 = vector.broadcast %4 : vector<16x1xf32> to vector<16x1024xf32>
    %6 = arith.addf %3, %5 : vector<16x1024xf32>
    %c0_6 = arith.constant 0 : index
    %c0_7 = arith.constant 0 : index
    %c0_8 = arith.constant 0 : index
    %7 = vector.load %arg4[%c0_6, %c0_7, %c0_8] : memref<1x16x1024xf32, #tpu.memory_space<vmem>>, vector<1x16x1024xf32>
    %8 = vector.shape_cast %7 : vector<1x16x1024xf32> to vector<16x1024xf32>
    %9 = vector.shape_cast %6 : vector<16x1024xf32> to vector<1x16x1024xf32>
    tpu.vector_store %arg4[%c0_6, %c0_7, %c0_8], %9 {strides = array<i32>} : memref<1x16x1024xf32, #tpu.memory_space<vmem>>, vector<1x16x1024xf32>,
    %cst_9 = arith.constant dense<0.000000e+00> : vector<16xf32>
    %10 = vector.multi_reduction <add>, %6, %cst_9 [1] : vector<16x1024xf32> to vector<16xf32>
    %11 = vector.shape_cast %10 : vector<16xf32> to vector<16x1xf32>
    %c0_10 = arith.constant 0 : index
    %c0_11 = arith.constant 0 : index
    %c0_12 = arith.constant 0 : index
    %12 = vector.load %arg5[%c0_10, %c0_11, %c0_12] : memref<1x16x1xf32, #tpu.memory_space<vmem>>, vector<1x16x1xf32>
    %13 = vector.shape_cast %12 : vector<1x16x1xf32> to vector<16x1xf32>
    %14 = vector.shape_cast %11 : vector<16x1xf32> to vector<1x16x1xf32>
    tpu.vector_store %arg5[%c0_10, %c0_11, %c0_12], %14 {strides = array<i32>} : memref<1x16x1xf32, #tpu.memory_space<vmem>>, vector<1x16x1xf32>,
    %15 = arith.mulf %6, %6 : vector<16x1024xf32>
    %cst_13 = arith.constant dense<0.000000e+00> : vector<16xf32>
    %16 = vector.multi_reduction <add>, %15, %cst_13 [1] : vector<16x1024xf32> to vector<16xf32>
    %17 = vector.shape_cast %16 : vector<16xf32> to vector<16x1xf32>
    %c0_14 = arith.constant 0 : index
    %c0_15 = arith.constant 0 : index
    %c0_16 = arith.constant 0 : index
    %18 = vector.load %arg6[%c0_14, %c0_15, %c0_16] : memref<1x16x1xf32, #tpu.memory_space<vmem>>, vector<1x16x1xf32>
    %19 = vector.shape_cast %18 : vector<1x16x1xf32> to vector<16x1xf32>
    %20 = vector.shape_cast %17 : vector<16x1xf32> to vector<1x16x1xf32>
    tpu.vector_store %arg6[%c0_14, %c0_15, %c0_16], %20 {strides = array<i32>} : memref<1x16x1xf32, #tpu.memory_space<vmem>>, vector<1x16x1xf32>,
    return
  }
  func.func @transform_0(%arg0: i32) -> (i32, i32, i32) {
    %c0_i32 = arith.constant 0 : i32
    %c0_i32_0 = arith.constant 0 : i32
    %c0_i32_1 = arith.constant 0 : i32
    return %arg0, %c0_i32, %c0_i32_0 : i32, i32, i32
  }
  func.func @transform_1(%arg0: i32) -> (i32, i32) {
    %c0_i32 = arith.constant 0 : i32
    %c0_i32_0 = arith.constant 0 : i32
    %c0_i32_1 = arith.constant 0 : i32
    return %c0_i32, %c0_i32_0 : i32, i32
  }
  func.func @transform_2(%arg0: i32) -> (i32, i32) {
    %c0_i32 = arith.constant 0 : i32
    %c0_i32_0 = arith.constant 0 : i32
    %c0_i32_1 = arith.constant 0 : i32
    return %c0_i32, %c0_i32_0 : i32, i32
  }
  func.func @transform_3(%arg0: i32) -> (i32, i32, i32) {
    %c0_i32 = arith.constant 0 : i32
    %c0_i32_0 = arith.constant 0 : i32
    %c0_i32_1 = arith.constant 0 : i32
    return %arg0, %c0_i32, %c0_i32_0 : i32, i32, i32
  }
  func.func @transform_4(%arg0: i32) -> (i32, i32, i32) {
    %c0_i32 = arith.constant 0 : i32
    %c0_i32_0 = arith.constant 0 : i32
    %c0_i32_1 = arith.constant 0 : i32
    return %arg0, %c0_i32, %c0_i32_0 : i32, i32, i32
  }
  func.func @transform_5(%arg0: i32) -> (i32, i32, i32) {
    %c0_i32 = arith.constant 0 : i32
    %c0_i32_0 = arith.constant 0 : i32
    %c0_i32_1 = arith.constant 0 : i32
    return %arg0, %c0_i32, %c0_i32_0 : i32, i32, i32
  }
}

module attributes {stable_mosaic.version = 11 : i64} {
  func.func @_bn_relu_kernel(%arg0: i32, %arg1: memref<1x16x1024xf32, #tpu.memory_space<vmem>>, %arg2: memref<16x1xf32, #tpu.memory_space<vmem>>, %arg3: memref<16x1xf32, #tpu.memory_space<vmem>>, %arg4: memref<1x16x1024xf32, #tpu.memory_space<vmem>>) attributes {dimension_semantics = [#tpu.dimension_semantics<parallel>], iteration_bounds = array<i64: 2>, scalar_prefetch = 0 : i64, scratch_operands = 0 : i64, tpu.core_type = #tpu.core_type<tc>, window_params = [{transform_indices = @transform_0, window_bounds = array<i64: 1, 16, 1024>}, {pipeline_mode = #tpu.pipeline_mode<synchronous>, transform_indices = @transform_1, window_bounds = array<i64: 16, 1>}, {pipeline_mode = #tpu.pipeline_mode<synchronous>, transform_indices = @transform_2, window_bounds = array<i64: 16, 1>}, {transform_indices = @transform_3, window_bounds = array<i64: 1, 16, 1024>}]} {
    %c0 = arith.constant 0 : index
    %c0_0 = arith.constant 0 : index
    %c0_1 = arith.constant 0 : index
    %0 = vector.load %arg1[%c0, %c0_0, %c0_1] : memref<1x16x1024xf32, #tpu.memory_space<vmem>>, vector<1x16x1024xf32>
    %1 = vector.shape_cast %0 : vector<1x16x1024xf32> to vector<16x1024xf32>
    %c0_2 = arith.constant 0 : index
    %c0_3 = arith.constant 0 : index
    %2 = vector.load %arg2[%c0_2, %c0_3] : memref<16x1xf32, #tpu.memory_space<vmem>>, vector<16x1xf32>
    %3 = vector.broadcast %2 : vector<16x1xf32> to vector<16x1024xf32>
    %4 = arith.mulf %1, %3 : vector<16x1024xf32>
    %c0_4 = arith.constant 0 : index
    %c0_5 = arith.constant 0 : index
    %5 = vector.load %arg3[%c0_4, %c0_5] : memref<16x1xf32, #tpu.memory_space<vmem>>, vector<16x1xf32>
    %6 = vector.broadcast %5 : vector<16x1xf32> to vector<16x1024xf32>
    %7 = arith.addf %4, %6 : vector<16x1024xf32>
    %cst = arith.constant 0.000000e+00 : f32
    %8 = vector.broadcast %cst : f32 to vector<16x1024xf32>
    %9 = arith.maximumf %7, %8 : vector<16x1024xf32>
    %c0_6 = arith.constant 0 : index
    %c0_7 = arith.constant 0 : index
    %c0_8 = arith.constant 0 : index
    %10 = vector.load %arg4[%c0_6, %c0_7, %c0_8] : memref<1x16x1024xf32, #tpu.memory_space<vmem>>, vector<1x16x1024xf32>
    %11 = vector.shape_cast %10 : vector<1x16x1024xf32> to vector<16x1024xf32>
    %12 = vector.shape_cast %9 : vector<16x1024xf32> to vector<1x16x1024xf32>
    tpu.vector_store %arg4[%c0_6, %c0_7, %c0_8], %12 {strides = array<i32>} : memref<1x16x1024xf32, #tpu.memory_space<vmem>>, vector<1x16x1024xf32>,
    return
  }
  func.func @transform_0(%arg0: i32) -> (i32, i32, i32) {
    %c0_i32 = arith.constant 0 : i32
    %c0_i32_0 = arith.constant 0 : i32
    %c0_i32_1 = arith.constant 0 : i32
    return %arg0, %c0_i32, %c0_i32_0 : i32, i32, i32
  }
  func.func @transform_1(%arg0: i32) -> (i32, i32) {
    %c0_i32 = arith.constant 0 : i32
    %c0_i32_0 = arith.constant 0 : i32
    %c0_i32_1 = arith.constant 0 : i32
    return %c0_i32, %c0_i32_0 : i32, i32
  }
  func.func @transform_2(%arg0: i32) -> (i32, i32) {
    %c0_i32 = arith.constant 0 : i32
    %c0_i32_0 = arith.constant 0 : i32
    %c0_i32_1 = arith.constant 0 : i32
    return %c0_i32, %c0_i32_0 : i32, i32
  }
  func.func @transform_3(%arg0: i32) -> (i32, i32, i32) {
    %c0_i32 = arith.constant 0 : i32
    %c0_i32_0 = arith.constant 0 : i32
    %c0_i32_1 = arith.constant 0 : i32
    return %arg0, %c0_i32, %c0_i32_0 : i32, i32, i32
  }
}

module attributes {stable_mosaic.version = 11 : i64} {
  func.func @_conv_bias_stats_kernel(%arg0: i32, %arg1: memref<1x144x1024xbf16, #tpu.memory_space<vmem>>, %arg2: memref<16x144xbf16, #tpu.memory_space<vmem>>, %arg3: memref<16x1xf32, #tpu.memory_space<vmem>>, %arg4: memref<1x16x1024xf32, #tpu.memory_space<vmem>>, %arg5: memref<1x16x1xf32, #tpu.memory_space<vmem>>, %arg6: memref<1x16x1xf32, #tpu.memory_space<vmem>>) attributes {dimension_semantics = [#tpu.dimension_semantics<parallel>], iteration_bounds = array<i64: 2>, scalar_prefetch = 0 : i64, scratch_operands = 0 : i64, tpu.core_type = #tpu.core_type<tc>, window_params = [{transform_indices = @transform_0, window_bounds = array<i64: 1, 144, 1024>}, {pipeline_mode = #tpu.pipeline_mode<synchronous>, transform_indices = @transform_1, window_bounds = array<i64: 16, 144>}, {pipeline_mode = #tpu.pipeline_mode<synchronous>, transform_indices = @transform_2, window_bounds = array<i64: 16, 1>}, {transform_indices = @transform_3, window_bounds = array<i64: 1, 16, 1024>}, {transform_indices = @transform_4, window_bounds = array<i64: 1, 16, 1>}, {transform_indices = @transform_5, window_bounds = array<i64: 1, 16, 1>}]} {
    %c0 = arith.constant 0 : index
    %c0_0 = arith.constant 0 : index
    %0 = vector.load %arg2[%c0, %c0_0] : memref<16x144xbf16, #tpu.memory_space<vmem>>, vector<16x144xbf16>
    %c0_1 = arith.constant 0 : index
    %c0_2 = arith.constant 0 : index
    %c0_3 = arith.constant 0 : index
    %1 = vector.load %arg1[%c0_1, %c0_2, %c0_3] : memref<1x144x1024xbf16, #tpu.memory_space<vmem>>, vector<1x144x1024xbf16>
    %2 = vector.shape_cast %1 : vector<1x144x1024xbf16> to vector<144x1024xbf16>
    %cst = arith.constant dense<0.000000e+00> : vector<16x1024xf32>
    %3 = tpu.matmul %0, %2, %cst {dimension_numbers = #tpu.dot_dimension_numbers<[1], [0], [0], [1], [0, 0, 1, 1], [], []>} : vector<16x144xbf16>, vector<144x1024xbf16>, vector<16x1024xf32> -> vector<16x1024xf32>
    %c0_4 = arith.constant 0 : index
    %c0_5 = arith.constant 0 : index
    %4 = vector.load %arg3[%c0_4, %c0_5] : memref<16x1xf32, #tpu.memory_space<vmem>>, vector<16x1xf32>
    %5 = vector.broadcast %4 : vector<16x1xf32> to vector<16x1024xf32>
    %6 = arith.addf %3, %5 : vector<16x1024xf32>
    %c0_6 = arith.constant 0 : index
    %c0_7 = arith.constant 0 : index
    %c0_8 = arith.constant 0 : index
    %7 = vector.load %arg4[%c0_6, %c0_7, %c0_8] : memref<1x16x1024xf32, #tpu.memory_space<vmem>>, vector<1x16x1024xf32>
    %8 = vector.shape_cast %7 : vector<1x16x1024xf32> to vector<16x1024xf32>
    %9 = vector.shape_cast %6 : vector<16x1024xf32> to vector<1x16x1024xf32>
    tpu.vector_store %arg4[%c0_6, %c0_7, %c0_8], %9 {strides = array<i32>} : memref<1x16x1024xf32, #tpu.memory_space<vmem>>, vector<1x16x1024xf32>,
    %cst_9 = arith.constant dense<0.000000e+00> : vector<16xf32>
    %10 = vector.multi_reduction <add>, %6, %cst_9 [1] : vector<16x1024xf32> to vector<16xf32>
    %11 = vector.shape_cast %10 : vector<16xf32> to vector<16x1xf32>
    %c0_10 = arith.constant 0 : index
    %c0_11 = arith.constant 0 : index
    %c0_12 = arith.constant 0 : index
    %12 = vector.load %arg5[%c0_10, %c0_11, %c0_12] : memref<1x16x1xf32, #tpu.memory_space<vmem>>, vector<1x16x1xf32>
    %13 = vector.shape_cast %12 : vector<1x16x1xf32> to vector<16x1xf32>
    %14 = vector.shape_cast %11 : vector<16x1xf32> to vector<1x16x1xf32>
    tpu.vector_store %arg5[%c0_10, %c0_11, %c0_12], %14 {strides = array<i32>} : memref<1x16x1xf32, #tpu.memory_space<vmem>>, vector<1x16x1xf32>,
    %15 = arith.mulf %6, %6 : vector<16x1024xf32>
    %cst_13 = arith.constant dense<0.000000e+00> : vector<16xf32>
    %16 = vector.multi_reduction <add>, %15, %cst_13 [1] : vector<16x1024xf32> to vector<16xf32>
    %17 = vector.shape_cast %16 : vector<16xf32> to vector<16x1xf32>
    %c0_14 = arith.constant 0 : index
    %c0_15 = arith.constant 0 : index
    %c0_16 = arith.constant 0 : index
    %18 = vector.load %arg6[%c0_14, %c0_15, %c0_16] : memref<1x16x1xf32, #tpu.memory_space<vmem>>, vector<1x16x1xf32>
    %19 = vector.shape_cast %18 : vector<1x16x1xf32> to vector<16x1xf32>
    %20 = vector.shape_cast %17 : vector<16x1xf32> to vector<1x16x1xf32>
    tpu.vector_store %arg6[%c0_14, %c0_15, %c0_16], %20 {strides = array<i32>} : memref<1x16x1xf32, #tpu.memory_space<vmem>>, vector<1x16x1xf32>,
    return
  }
  func.func @transform_0(%arg0: i32) -> (i32, i32, i32) {
    %c0_i32 = arith.constant 0 : i32
    %c0_i32_0 = arith.constant 0 : i32
    %c0_i32_1 = arith.constant 0 : i32
    return %arg0, %c0_i32, %c0_i32_0 : i32, i32, i32
  }
  func.func @transform_1(%arg0: i32) -> (i32, i32) {
    %c0_i32 = arith.constant 0 : i32
    %c0_i32_0 = arith.constant 0 : i32
    %c0_i32_1 = arith.constant 0 : i32
    return %c0_i32, %c0_i32_0 : i32, i32
  }
  func.func @transform_2(%arg0: i32) -> (i32, i32) {
    %c0_i32 = arith.constant 0 : i32
    %c0_i32_0 = arith.constant 0 : i32
    %c0_i32_1 = arith.constant 0 : i32
    return %c0_i32, %c0_i32_0 : i32, i32
  }
  func.func @transform_3(%arg0: i32) -> (i32, i32, i32) {
    %c0_i32 = arith.constant 0 : i32
    %c0_i32_0 = arith.constant 0 : i32
    %c0_i32_1 = arith.constant 0 : i32
    return %arg0, %c0_i32, %c0_i32_0 : i32, i32, i32
  }
  func.func @transform_4(%arg0: i32) -> (i32, i32, i32) {
    %c0_i32 = arith.constant 0 : i32
    %c0_i32_0 = arith.constant 0 : i32
    %c0_i32_1 = arith.constant 0 : i32
    return %arg0, %c0_i32, %c0_i32_0 : i32, i32, i32
  }
  func.func @transform_5(%arg0: i32) -> (i32, i32, i32) {
    %c0_i32 = arith.constant 0 : i32
    %c0_i32_0 = arith.constant 0 : i32
    %c0_i32_1 = arith.constant 0 : i32
    return %arg0, %c0_i32, %c0_i32_0 : i32, i32, i32
  }
}

</mosaic_0001>

<llo_original>
// kernel: decoder_block_forward.5
$region0: #{decoder_block_forward.5}
  #allocation0 [shape = 'u32[]', space=smem, size = 0x4, offset = 0x4, fixed_abs, tag = 'smem constant byte address 0x4 - core index']
  #allocation1 [shape = 'u32[72,128]{1,0:T(1,128)}', space=vmem, size = 0x9000, scoped, tag = 'internal scratch']
  %s0 = inlined_call_operand.vmem [shape: f32[2,16,1024], index: 0, kind: input, shape index: {}]
  %s1 = inlined_call_operand.vmem [shape: f32[16,1], index: 1, kind: input, shape index: {}]
  %s2 = inlined_call_operand.vmem [shape: f32[16,1], index: 2, kind: input, shape index: {}]
  %s3 = inlined_call_operand.vmem [shape: f32[2,16,1024], index: 3, kind: output, shape index: {}]
  %s4 = sld [smem:[#allocation0]]
  $region45: #{decoder_block_forward.5} parent=0
    _
  %s6 = ssub.s32 1, %s4
  %s7 = scalar_select 0, %s6, %s4
  loop: start=0, step=1, limit=4
  $region2: #{decoder_block_forward.5} parent=0 // loop_pre_header
    _
  $region3: #{decoder_block_forward.5} parent=0 // loop_header
    %s9 = sphi 0, %s13
    %p10 = scmp.ge.s32.totalorder %s9, 4
    %s19 = sphi 0, %s21
    %s22 = sphi 0, %s19
    %s23 = sphi 0, %s22
    %s39 = sphi 0, %s23
    %s43 = sphi 0, %s43
    %s45 = sphi 0, %s43
    %s46 = sphi 0, %s45
    %s60 = sphi 0, %s46
    %s64 = sphi 0, %s64
    %s66 = sphi 0, %s64
    %s67 = sphi 0, %s66
    %s81 = sphi 0, %s67
    %s87 = sphi 0, %s89
    %s90 = sphi 0, %s87
    %s91 = sphi 0, %s90
    %s107 = sphi 0, %s91
  $region4: #{decoder_block_forward.5} parent=0 // loop_header_branch
    %12 = sbr.rel (%p10) target = $region8
  $region5: #{decoder_block_forward.5} parent=0 // loop_body
    %s14 = ssub.s32 %s9, 1
    %s15 = ssub.s32 %s9, 2
    %s16 = sadd.s32 %s9, 1
    %s17 = ssub.s32 %s9, %s16
    %p18 = scmp.eq.s32.totalorder %s17, 0
    %s20 = sadd.s32 %s19, 1
    %s21 = scalar_select %p18, %s19, %s20
    %p24 = pneg %p18
    %p25 = scmp.eq.s32.totalorder %s9, 1
    %p26 = por %p24, %p25
    %p27 = scmp.ne.s32.totalorder %s19, %s22
    %p28 = scmp.eq.s32.totalorder %s9, 0
    %p29 = por %p27, %p28
    %p30 = scmp.ne.s32.totalorder %s19, %s22
    %p31 = scmp.eq.s32.totalorder %s14, 1
    %p32 = por %p30, %p31
    %p33 = scmp.ne.s32.totalorder %s22, %s23
    %p34 = scmp.eq.s32.totalorder %s14, 0
    %p35 = por %p33, %p34
    %p36 = scmp.ne.s32.totalorder %s22, %s23
    %p37 = scmp.eq.s32.totalorder %s15, 1
    %p38 = por %p36, %p37
    %p40 = scmp.ne.s32.totalorder %s23, %s39
    %p41 = scmp.eq.s32.totalorder %s15, 0
    %p42 = por %p40, %p41
    %s44 = sadd.s32 %s43, 1
    %p47 = scmp.eq.s32.totalorder %s9, 1
    %p48 = scmp.ne.s32.totalorder %s43, %s45
    %p49 = scmp.eq.s32.totalorder %s9, 0
    %p50 = por %p48, %p49
    %p51 = scmp.ne.s32.totalorder %s43, %s45
    %p52 = scmp.eq.s32.totalorder %s14, 1
    %p53 = por %p51, %p52
    %p54 = scmp.ne.s32.totalorder %s45, %s46
    %p55 = scmp.eq.s32.totalorder %s14, 0
    %p56 = por %p54, %p55
    %p57 = scmp.ne.s32.totalorder %s45, %s46
    %p58 = scmp.eq.s32.totalorder %s15, 1
    %p59 = por %p57, %p58
    %p61 = scmp.ne.s32.totalorder %s46, %s60
    %p62 = scmp.eq.s32.totalorder %s15, 0
    %p63 = por %p61, %p62
    %s65 = sadd.s32 %s64, 1
    %p68 = scmp.eq.s32.totalorder %s9, 1
    %p69 = scmp.ne.s32.totalorder %s64, %s66
    %p70 = scmp.eq.s32.totalorder %s9, 0
    %p71 = por %p69, %p70
    %p72 = scmp.ne.s32.totalorder %s64, %s66
    %p73 = scmp.eq.s32.totalorder %s14, 1
    %p74 = por %p72, %p73
    %p75 = scmp.ne.s32.totalorder %s66, %s67
    %p76 = scmp.eq.s32.totalorder %s14, 0
    %p77 = por %p75, %p76
    %p78 = scmp.ne.s32.totalorder %s66, %s67
    %p79 = scmp.eq.s32.totalorder %s15, 1
    %p80 = por %p78, %p79
    %p82 = scmp.ne.s32.totalorder %s67, %s81
    %p83 = scmp.eq.s32.totalorder %s15, 0
    %p84 = por %p82, %p83
    %s85 = ssub.s32 %s9, %s16
    %p86 = scmp.eq.s32.totalorder %s85, 0
    %s88 = sadd.s32 %s87, 1
    %s89 = scalar_select %p86, %s87, %s88
    %p92 = pneg %p86
    %p93 = scmp.eq.s32.totalorder %s9, 1
    %p94 = por %p92, %p93
    %p95 = scmp.ne.s32.totalorder %s87, %s90
    %p96 = scmp.eq.s32.totalorder %s9, 0
    %p97 = por %p95, %p96
    %p98 = scmp.ne.s32.totalorder %s87, %s90
    %p99 = scmp.eq.s32.totalorder %s14, 1
    %p100 = por %p98, %p99
    %p101 = scmp.ne.s32.totalorder %s90, %s91
    %p102 = scmp.eq.s32.totalorder %s14, 0
    %p103 = por %p101, %p102
    %p104 = scmp.ne.s32.totalorder %s90, %s91
    %p105 = scmp.eq.s32.totalorder %s15, 1
    %p106 = por %p104, %p105
    %p108 = scmp.ne.s32.totalorder %s91, %s107
    %p109 = scmp.eq.s32.totalorder %s15, 0
    %p110 = por %p108, %p109
    %p111 = scmp.le.s32.totalorder 1, %s9
    %p112 = scmp.lt.s32.totalorder %s9, 3
    %p113 = pnand %p111, %p112
    %p114 = pneg %p113
    // Predicated region
    $region9: #{decoder_block_forward.5} parent=5 // pred_check
      _
    $region10: #{decoder_block_forward.5} parent=5 // pred_check_branch
      %116 = sbr.rel (%p113) target = $region12
    $region11: #{decoder_block_forward.5} parent=5 // pred_region
      %s117 = ssub.s32 %s9, 1
      // Predicated region
      $region13: #{decoder_block_forward.5} parent=11 // pred_check
        %p118 = pneg %p56
      $region14: #{decoder_block_forward.5} parent=11 // pred_check_branch
        %120 = sbr.rel (%p118) target = $region16
      $region15: #{decoder_block_forward.5} parent=11 // pred_region
        _
      $region16: #{decoder_block_forward.5} parent=11 // pred_fallthru
        _
      // Predicated region
      $region17: #{decoder_block_forward.5} parent=11 // pred_check
        %p121 = pneg %p77
      $region18: #{decoder_block_forward.5} parent=11 // pred_check_branch
        %123 = sbr.rel (%p121) target = $region20
      $region19: #{decoder_block_forward.5} parent=11 // pred_region
        _
      $region20: #{decoder_block_forward.5} parent=11 // pred_fallthru
        _
    $region12: #{decoder_block_forward.5} parent=5 // pred_fallthru
      _
    %p124 = scmp.lt.s32.totalorder %s9, 2
    // Predicated region
    $region21: #{decoder_block_forward.5} parent=5 // pred_check
      %p125 = pneg %p124
    $region22: #{decoder_block_forward.5} parent=5 // pred_check_branch
      %127 = sbr.rel (%p125) target = $region24
    $region23: #{decoder_block_forward.5} parent=5 // pred_region
      // Predicated region
      $region25: #{decoder_block_forward.5} parent=23 // pred_check
        %p128 = pneg %p29
      $region26: #{decoder_block_forward.5} parent=23 // pred_check_branch
        %130 = sbr.rel (%p128) target = $region28
      $region27: #{decoder_block_forward.5} parent=23 // pred_region
        %p131 = scmp.lt.s32.totalorder %s9, 1
        %s132 = scalar_select %p131, %s9, 1
        %s133 = smul.addr %s132, 16
        %s134 = smul.addr %s133, 8
        %s135 = scalar_lea.vmem %s0, %s134
      $region28: #{decoder_block_forward.5} parent=23 // pred_fallthru
        _
    $region24: #{decoder_block_forward.5} parent=5 // pred_fallthru
      _
    %p136 = scmp.le.s32.totalorder 1, %s9
    %p137 = scmp.lt.s32.totalorder %s9, 3
    %p138 = pnand %p136, %p137
    %p139 = pneg %p138
    // Predicated region
    $region29: #{decoder_block_forward.5} parent=5 // pred_check
      _
    $region30: #{decoder_block_forward.5} parent=5 // pred_check_branch
      %141 = sbr.rel (%p138) target = $region32
    $region31: #{decoder_block_forward.5} parent=5 // pred_region
      %s142 = ssub.s32 %s9, 1
      %p143 = scmp.lt.s32.totalorder %s14, 1
      %s144 = scalar_select %p143, %s14, 1
      %s145 = smul.addr %s144, 16
      %s146 = smul.addr %s145, 8
      %s147 = scalar_lea.vmem %s0, %s146
      %p148 = pneg %p35
      %p149 = pneg %p32
      %p150 = pneg %p56
      %p151 = pneg %p53
      %p152 = pneg %p77
      %p153 = pneg %p74
      %p154 = pneg %p103
      %p155 = pneg %p100
      %p156 = scmp.lt.s32.totalorder %s14, 1
      %s157 = scalar_select %p156, %s14, 1
      %s158 = smul.addr %s157, 16
      %s159 = smul.addr %s158, 8
      %s160 = scalar_lea.vmem %s3, %s159
      %p161 = scmp.lt.s32.totalorder %s14, 1
      %s162 = scalar_select %p161, %s14, 1
      %s163 = smul.addr %s162, 16
      %s164 = smul.addr %s163, 8
      %s165 = scalar_lea.vmem %s0, %s164
      %p166 = scmp.lt.s32.totalorder %s14, 1
      %s167 = scalar_select %p166, %s14, 1
      %s168 = smul.addr %s167, 16
      %s169 = smul.addr %s168, 8
      %s170 = scalar_lea.vmem %s3, %s169
      %v171 = vld [vmem:[%s165] sm:$0xff]
      %v172 = vld [vmem:[%s165 + $0x8] sm:$0xff]
      %v173 = vld [vmem:[%s165 + $0x10] sm:$0xff]
      %v174 = vld [vmem:[%s165 + $0x18] sm:$0xff]
      %v175 = vld [vmem:[%s165 + $0x20] sm:$0xff]
      %v176 = vld [vmem:[%s165 + $0x28] sm:$0xff]
      %v177 = vld [vmem:[%s165 + $0x30] sm:$0xff]
      %v178 = vld [vmem:[%s165 + $0x38] sm:$0xff]
      %v179 = vld [vmem:[%s165 + $0x40] sm:$0xff]
      %v180 = vld [vmem:[%s165 + $0x48] sm:$0xff]
      %v181 = vld [vmem:[%s165 + $0x50] sm:$0xff]
      %v182 = vld [vmem:[%s165 + $0x58] sm:$0xff]
      %v183 = vld [vmem:[%s165 + $0x60] sm:$0xff]
      %v184 = vld [vmem:[%s165 + $0x68] sm:$0xff]
      %v185 = vld [vmem:[%s165 + $0x70] sm:$0xff]
      %v186 = vld [vmem:[%s165 + $0x78] sm:$0xff]
      %v187 = vld [vmem:[%s1] sm:$0xff]
      %v188 = vld [vmem:[%s1 + $0x8] sm:$0xff]
      %190 = vset.pattern.permute.xlu0 0
      %191 = vperm.xlu0 %190, %v187
      %v192 = vpop.permute.xlu0 %191
      %195 = vset.pattern.permute.xlu0 0
      %196 = vperm.xlu0 %195, %v188
      %v197 = vpop.permute.xlu0 %196
      %v199 = vmul.f32 %v171, %v192
      %v200 = vmul.f32 %v172, %v192
      %v201 = vmul.f32 %v173, %v192
      %v202 = vmul.f32 %v174, %v192
      %v203 = vmul.f32 %v175, %v192
      %v204 = vmul.f32 %v176, %v192
      %v205 = vmul.f32 %v177, %v192
      %v206 = vmul.f32 %v178, %v192
      %v207 = vmul.f32 %v179, %v197
      %v208 = vmul.f32 %v180, %v197
      %v209 = vmul.f32 %v181, %v197
      %v210 = vmul.f32 %v182, %v197
      %v211 = vmul.f32 %v183, %v197
      %v212 = vmul.f32 %v184, %v197
      %v213 = vmul.f32 %v185, %v197
      %v214 = vmul.f32 %v186, %v197
      %v215 = vld [vmem:[%s2] sm:$0xff]
      %v216 = vld [vmem:[%s2 + $0x8] sm:$0xff]
      %218 = vset.pattern.permute.xlu0 0
      %219 = vperm.xlu0 %218, %v215
      %v220 = vpop.permute.xlu0 %219
      %223 = vset.pattern.permute.xlu0 0
      %224 = vperm.xlu0 %223, %v216
      %v225 = vpop.permute.xlu0 %224
      %v227 = vadd.f32 %v199, %v220
      %v228 = vadd.f32 %v200, %v220
      %v229 = vadd.f32 %v201, %v220
      %v230 = vadd.f32 %v202, %v220
      %v231 = vadd.f32 %v203, %v220
      %v232 = vadd.f32 %v204, %v220
      %v233 = vadd.f32 %v205, %v220
      %v234 = vadd.f32 %v206, %v220
      %v235 = vadd.f32 %v207, %v225
      %v236 = vadd.f32 %v208, %v225
      %v237 = vadd.f32 %v209, %v225
      %v238 = vadd.f32 %v210, %v225
      %v239 = vadd.f32 %v211, %v225
      %v240 = vadd.f32 %v212, %v225
      %v241 = vadd.f32 %v213, %v225
      %v242 = vadd.f32 %v214, %v225
      %v243 = vmax.f32 %v227, 0.0
      %v244 = vmax.f32 %v228, 0.0
      %v245 = vmax.f32 %v229, 0.0
      %v246 = vmax.f32 %v230, 0.0
      %v247 = vmax.f32 %v231, 0.0
      %v248 = vmax.f32 %v232, 0.0
      %v249 = vmax.f32 %v233, 0.0
      %v250 = vmax.f32 %v234, 0.0
      %v251 = vmax.f32 %v235, 0.0
      %v252 = vmax.f32 %v236, 0.0
      %v253 = vmax.f32 %v237, 0.0
      %v254 = vmax.f32 %v238, 0.0
      %v255 = vmax.f32 %v239, 0.0
      %v256 = vmax.f32 %v240, 0.0
      %v257 = vmax.f32 %v241, 0.0
      %v258 = vmax.f32 %v242, 0.0
      %259 = vst [vmem:[%s170] sm:$0xff] %v243
      %260 = vst [vmem:[%s170 + $0x8] sm:$0xff] %v244
      %261 = vst [vmem:[%s170 + $0x10] sm:$0xff] %v245
      %262 = vst [vmem:[%s170 + $0x18] sm:$0xff] %v246
      %263 = vst [vmem:[%s170 + $0x20] sm:$0xff] %v247
      %264 = vst [vmem:[%s170 + $0x28] sm:$0xff] %v248
      %265 = vst [vmem:[%s170 + $0x30] sm:$0xff] %v249
      %266 = vst [vmem:[%s170 + $0x38] sm:$0xff] %v250
      %267 = vst [vmem:[%s170 + $0x40] sm:$0xff] %v251
      %268 = vst [vmem:[%s170 + $0x48] sm:$0xff] %v252
      %269 = vst [vmem:[%s170 + $0x50] sm:$0xff] %v253
      %270 = vst [vmem:[%s170 + $0x58] sm:$0xff] %v254
      %271 = vst [vmem:[%s170 + $0x60] sm:$0xff] %v255
      %272 = vst [vmem:[%s170 + $0x68] sm:$0xff] %v256
      %273 = vst [vmem:[%s170 + $0x70] sm:$0xff] %v257
      %274 = vst [vmem:[%s170 + $0x78] sm:$0xff] %v258
      %p275 = scmp.lt.s32.totalorder %s14, 1
      %s276 = scalar_select %p275, %s14, 1
      %s277 = smul.addr %s276, 16
      %s278 = smul.addr %s277, 8
      %s279 = scalar_lea.vmem %s3, %s278
      // Predicated region
      $region33: #{decoder_block_forward.5} parent=31 // pred_check
        %p280 = pneg %p100
      $region34: #{decoder_block_forward.5} parent=31 // pred_check_branch
        %282 = sbr.rel (%p280) target = $region36
      $region35: #{decoder_block_forward.5} parent=31 // pred_region
        _
      $region36: #{decoder_block_forward.5} parent=31 // pred_fallthru
        _
    $region32: #{decoder_block_forward.5} parent=5 // pred_fallthru
      _
    %p283 = scmp.le.s32.totalorder 2, %s9
    // Predicated region
    $region37: #{decoder_block_forward.5} parent=5 // pred_check
      %p284 = pneg %p283
    $region38: #{decoder_block_forward.5} parent=5 // pred_check_branch
      %286 = sbr.rel (%p284) target = $region40
    $region39: #{decoder_block_forward.5} parent=5 // pred_region
      %s287 = ssub.s32 %s9, 2
      // Predicated region
      $region41: #{decoder_block_forward.5} parent=39 // pred_check
        %p288 = pneg %p106
      $region42: #{decoder_block_forward.5} parent=39 // pred_check_branch
        %290 = sbr.rel (%p288) target = $region44
      $region43: #{decoder_block_forward.5} parent=39 // pred_region
        %p291 = scmp.lt.s32.totalorder %s15, 1
        %s292 = scalar_select %p291, %s15, 1
        %s293 = smul.addr %s292, 16
        %s294 = smul.addr %s293, 8
        %s295 = scalar_lea.vmem %s3, %s294
      $region44: #{decoder_block_forward.5} parent=39 // pred_fallthru
        _
    $region40: #{decoder_block_forward.5} parent=5 // pred_fallthru
      _
  $region6: #{decoder_block_forward.5} parent=0 // loop_footer
    %s13 = sadd.s32 1, %s9
  $region7: #{decoder_block_forward.5} parent=0 // loop_footer_branch
    %8 = sbr.rel target = $region3
  $region8: #{decoder_block_forward.5} parent=0 // loop_exit
    _

// kernel: decoder_block_forward.4
$region0: #{decoder_block_forward.4}
  #allocation0 [shape = 'u32[]', space=smem, size = 0x4, offset = 0x4, fixed_abs, tag = 'smem constant byte address 0x4 - core index']
  #allocation1 [shape = 'u32[72,128]{1,0:T(1,128)}', space=vmem, size = 0x9000, scoped, tag = 'internal scratch']
  %s0 = inlined_call_operand.vmem [shape: bf16[2,72,1024], index: 0, kind: input, shape index: {}]
  %s1 = inlined_call_operand.vmem [shape: bf16[16,72], index: 1, kind: input, shape index: {}]
  %s2 = inlined_call_operand.vmem [shape: f32[16,1], index: 2, kind: input, shape index: {}]
  %s3 = inlined_call_operand.vmem [shape: f32[2,16,1024], index: 3, kind: output, shape index: {0}]
  %s4 = inlined_call_operand.vmem [shape: f32[2,16,1], index: 4, kind: output, shape index: {1}]
  %s5 = inlined_call_operand.vmem [shape: f32[2,16,1], index: 5, kind: output, shape index: {2}]
  %6 = xla_tuple %s3, %s4, %s5
  %s7 = sld [smem:[#allocation0]]
  $region61: #{decoder_block_forward.4} parent=0
    _
  %s9 = ssub.s32 1, %s7
  %s10 = scalar_select 0, %s9, %s7
  loop: start=0, step=1, limit=4
  $region2: #{decoder_block_forward.4} parent=0 // loop_pre_header
    _
  $region3: #{decoder_block_forward.4} parent=0 // loop_header
    %s12 = sphi 0, %s16
    %p13 = scmp.ge.s32.totalorder %s12, 4
    %s22 = sphi 0, %s24
    %s25 = sphi 0, %s22
    %s26 = sphi 0, %s25
    %s42 = sphi 0, %s26
    %s46 = sphi 0, %s46
    %s48 = sphi 0, %s46
    %s49 = sphi 0, %s48
    %s63 = sphi 0, %s49
    %s67 = sphi 0, %s67
    %s69 = sphi 0, %s67
    %s70 = sphi 0, %s69
    %s84 = sphi 0, %s70
    %s90 = sphi 0, %s92
    %s93 = sphi 0, %s90
    %s94 = sphi 0, %s93
    %s110 = sphi 0, %s94
    %s116 = sphi 0, %s118
    %s119 = sphi 0, %s116
    %s120 = sphi 0, %s119
    %s136 = sphi 0, %s120
    %s142 = sphi 0, %s144
    %s145 = sphi 0, %s142
    %s146 = sphi 0, %s145
    %s162 = sphi 0, %s146
  $region4: #{decoder_block_forward.4} parent=0 // loop_header_branch
    %15 = sbr.rel (%p13) target = $region8
  $region5: #{decoder_block_forward.4} parent=0 // loop_body
    %s17 = ssub.s32 %s12, 1
    %s18 = ssub.s32 %s12, 2
    %s19 = sadd.s32 %s12, 1
    %s20 = ssub.s32 %s12, %s19
    %p21 = scmp.eq.s32.totalorder %s20, 0
    %s23 = sadd.s32 %s22, 1
    %s24 = scalar_select %p21, %s22, %s23
    %p27 = pneg %p21
    %p28 = scmp.eq.s32.totalorder %s12, 1
    %p29 = por %p27, %p28
    %p30 = scmp.ne.s32.totalorder %s22, %s25
    %p31 = scmp.eq.s32.totalorder %s12, 0
    %p32 = por %p30, %p31
    %p33 = scmp.ne.s32.totalorder %s22, %s25
    %p34 = scmp.eq.s32.totalorder %s17, 1
    %p35 = por %p33, %p34
    %p36 = scmp.ne.s32.totalorder %s25, %s26
    %p37 = scmp.eq.s32.totalorder %s17, 0
    %p38 = por %p36, %p37
    %p39 = scmp.ne.s32.totalorder %s25, %s26
    %p40 = scmp.eq.s32.totalorder %s18, 1
    %p41 = por %p39, %p40
    %p43 = scmp.ne.s32.totalorder %s26, %s42
    %p44 = scmp.eq.s32.totalorder %s18, 0
    %p45 = por %p43, %p44
    %s47 = sadd.s32 %s46, 1
    %p50 = scmp.eq.s32.totalorder %s12, 1
    %p51 = scmp.ne.s32.totalorder %s46, %s48
    %p52 = scmp.eq.s32.totalorder %s12, 0
    %p53 = por %p51, %p52
    %p54 = scmp.ne.s32.totalorder %s46, %s48
    %p55 = scmp.eq.s32.totalorder %s17, 1
    %p56 = por %p54, %p55
    %p57 = scmp.ne.s32.totalorder %s48, %s49
    %p58 = scmp.eq.s32.totalorder %s17, 0
    %p59 = por %p57, %p58
    %p60 = scmp.ne.s32.totalorder %s48, %s49
    %p61 = scmp.eq.s32.totalorder %s18, 1
    %p62 = por %p60, %p61
    %p64 = scmp.ne.s32.totalorder %s49, %s63
    %p65 = scmp.eq.s32.totalorder %s18, 0
    %p66 = por %p64, %p65
    %s68 = sadd.s32 %s67, 1
    %p71 = scmp.eq.s32.totalorder %s12, 1
    %p72 = scmp.ne.s32.totalorder %s67, %s69
    %p73 = scmp.eq.s32.totalorder %s12, 0
    %p74 = por %p72, %p73
    %p75 = scmp.ne.s32.totalorder %s67, %s69
    %p76 = scmp.eq.s32.totalorder %s17, 1
    %p77 = por %p75, %p76
    %p78 = scmp.ne.s32.totalorder %s69, %s70
    %p79 = scmp.eq.s32.totalorder %s17, 0
    %p80 = por %p78, %p79
    %p81 = scmp.ne.s32.totalorder %s69, %s70
    %p82 = scmp.eq.s32.totalorder %s18, 1
    %p83 = por %p81, %p82
    %p85 = scmp.ne.s32.totalorder %s70, %s84
    %p86 = scmp.eq.s32.totalorder %s18, 0
    %p87 = por %p85, %p86
    %s88 = ssub.s32 %s12, %s19
    %p89 = scmp.eq.s32.totalorder %s88, 0
    %s91 = sadd.s32 %s90, 1
    %s92 = scalar_select %p89, %s90, %s91
    %p95 = pneg %p89
    %p96 = scmp.eq.s32.totalorder %s12, 1
    %p97 = por %p95, %p96
    %p98 = scmp.ne.s32.totalorder %s90, %s93
    %p99 = scmp.eq.s32.totalorder %s12, 0
    %p100 = por %p98, %p99
    %p101 = scmp.ne.s32.totalorder %s90, %s93
    %p102 = scmp.eq.s32.totalorder %s17, 1
    %p103 = por %p101, %p102
    %p104 = scmp.ne.s32.totalorder %s93, %s94
    %p105 = scmp.eq.s32.totalorder %s17, 0
    %p106 = por %p104, %p105
    %p107 = scmp.ne.s32.totalorder %s93, %s94
    %p108 = scmp.eq.s32.totalorder %s18, 1
    %p109 = por %p107, %p108
    %p111 = scmp.ne.s32.totalorder %s94, %s110
    %p112 = scmp.eq.s32.totalorder %s18, 0
    %p113 = por %p111, %p112
    %s114 = ssub.s32 %s12, %s19
    %p115 = scmp.eq.s32.totalorder %s114, 0
    %s117 = sadd.s32 %s116, 1
    %s118 = scalar_select %p115, %s116, %s117
    %p121 = pneg %p115
    %p122 = scmp.eq.s32.totalorder %s12, 1
    %p123 = por %p121, %p122
    %p124 = scmp.ne.s32.totalorder %s116, %s119
    %p125 = scmp.eq.s32.totalorder %s12, 0
    %p126 = por %p124, %p125
    %p127 = scmp.ne.s32.totalorder %s116, %s119
    %p128 = scmp.eq.s32.totalorder %s17, 1
    %p129 = por %p127, %p128
    %p130 = scmp.ne.s32.totalorder %s119, %s120
    %p131 = scmp.eq.s32.totalorder %s17, 0
    %p132 = por %p130, %p131
    %p133 = scmp.ne.s32.totalorder %s119, %s120
    %p134 = scmp.eq.s32.totalorder %s18, 1
    %p135 = por %p133, %p134
    %p137 = scmp.ne.s32.totalorder %s120, %s136
    %p138 = scmp.eq.s32.totalorder %s18, 0
    %p139 = por %p137, %p138
    %s140 = ssub.s32 %s12, %s19
    %p141 = scmp.eq.s32.totalorder %s140, 0
    %s143 = sadd.s32 %s142, 1
    %s144 = scalar_select %p141, %s142, %s143
    %p147 = pneg %p141
    %p148 = scmp.eq.s32.totalorder %s12, 1
    %p149 = por %p147, %p148
    %p150 = scmp.ne.s32.totalorder %s142, %s145
    %p151 = scmp.eq.s32.totalorder %s12, 0
    %p152 = por %p150, %p151
    %p153 = scmp.ne.s32.totalorder %s142, %s145
    %p154 = scmp.eq.s32.totalorder %s17, 1
    %p155 = por %p153, %p154
    %p156 = scmp.ne.s32.totalorder %s145, %s146
    %p157 = scmp.eq.s32.totalorder %s17, 0
    %p158 = por %p156, %p157
    %p159 = scmp.ne.s32.totalorder %s145, %s146
    %p160 = scmp.eq.s32.totalorder %s18, 1
    %p161 = por %p159, %p160
    %p163 = scmp.ne.s32.totalorder %s146, %s162
    %p164 = scmp.eq.s32.totalorder %s18, 0
    %p165 = por %p163, %p164
    %p166 = scmp.le.s32.totalorder 1, %s12
    %p167 = scmp.lt.s32.totalorder %s12, 3
    %p168 = pnand %p166, %p167
    %p169 = pneg %p168
    // Predicated region
    $region9: #{decoder_block_forward.4} parent=5 // pred_check
      _
    $region10: #{decoder_block_forward.4} parent=5 // pred_check_branch
      %171 = sbr.rel (%p168) target = $region12
    $region11: #{decoder_block_forward.4} parent=5 // pred_region
      %s172 = ssub.s32 %s12, 1
      // Predicated region
      $region13: #{decoder_block_forward.4} parent=11 // pred_check
        %p173 = pneg %p59
      $region14: #{decoder_block_forward.4} parent=11 // pred_check_branch
        %175 = sbr.rel (%p173) target = $region16
      $region15: #{decoder_block_forward.4} parent=11 // pred_region
        _
      $region16: #{decoder_block_forward.4} parent=11 // pred_fallthru
        _
      // Predicated region
      $region17: #{decoder_block_forward.4} parent=11 // pred_check
        %p176 = pneg %p80
      $region18: #{decoder_block_forward.4} parent=11 // pred_check_branch
        %178 = sbr.rel (%p176) target = $region20
      $region19: #{decoder_block_forward.4} parent=11 // pred_region
        _
      $region20: #{decoder_block_forward.4} parent=11 // pred_fallthru
        _
    $region12: #{decoder_block_forward.4} parent=5 // pred_fallthru
      _
    %p179 = scmp.lt.s32.totalorder %s12, 2
    // Predicated region
    $region21: #{decoder_block_forward.4} parent=5 // pred_check
      %p180 = pneg %p179
    $region22: #{decoder_block_forward.4} parent=5 // pred_check_branch
      %182 = sbr.rel (%p180) target = $region24
    $region23: #{decoder_block_forward.4} parent=5 // pred_region
      // Predicated region
      $region25: #{decoder_block_forward.4} parent=23 // pred_check
        %p183 = pneg %p32
      $region26: #{decoder_block_forward.4} parent=23 // pred_check_branch
        %185 = sbr.rel (%p183) target = $region28
      $region27: #{decoder_block_forward.4} parent=23 // pred_region
        %p186 = scmp.lt.s32.totalorder %s12, 1
        %s187 = scalar_select %p186, %s12, 1
        %s188 = smul.addr %s187, 72
        %s189 = smul.addr %s188, 4
        %s190 = scalar_lea.vmem %s0, %s189
      $region28: #{decoder_block_forward.4} parent=23 // pred_fallthru
        _
    $region24: #{decoder_block_forward.4} parent=5 // pred_fallthru
      _
    %p191 = scmp.le.s32.totalorder 1, %s12
    %p192 = scmp.lt.s32.totalorder %s12, 3
    %p193 = pnand %p191, %p192
    %p194 = pneg %p193
    // Predicated region
    $region29: #{decoder_block_forward.4} parent=5 // pred_check
      _
    $region30: #{decoder_block_forward.4} parent=5 // pred_check_branch
      %196 = sbr.rel (%p193) target = $region32
    $region31: #{decoder_block_forward.4} parent=5 // pred_region
      %s197 = ssub.s32 %s12, 1
      %p198 = scmp.lt.s32.totalorder %s17, 1
      %s199 = scalar_select %p198, %s17, 1
      %s200 = smul.addr %s199, 72
      %s201 = smul.addr %s200, 4
      %s202 = scalar_lea.vmem %s0, %s201
      %p203 = pneg %p38
      %p204 = pneg %p35
      %p205 = pneg %p59
      %p206 = pneg %p56
      %p207 = pneg %p80
      %p208 = pneg %p77
      %p209 = pneg %p106
      %p210 = pneg %p103
      %p211 = scmp.lt.s32.totalorder %s17, 1
      %s212 = scalar_select %p211, %s17, 1
      %s213 = smul.addr %s212, 16
      %s214 = smul.addr %s213, 8
      %s215 = scalar_lea.vmem %s3, %s214
      %p216 = pneg %p132
      %p217 = pneg %p129
      %p218 = scmp.lt.s32.totalorder %s17, 1
      %s219 = scalar_select %p218, %s17, 1
      %s220 = smul.addr %s219, 2
      %s221 = smul.addr %s220, 8
      %s222 = scalar_lea.vmem %s4, %s221
      %p223 = pneg %p158
      %p224 = pneg %p155
      %p225 = scmp.lt.s32.totalorder %s17, 1
      %s226 = scalar_select %p225, %s17, 1
      %s227 = smul.addr %s226, 2
      %s228 = smul.addr %s227, 8
      %s229 = scalar_lea.vmem %s5, %s228
      %p230 = scmp.lt.s32.totalorder %s17, 1
      %s231 = scalar_select %p230, %s17, 1
      %s232 = smul.addr %s231, 72
      %s233 = smul.addr %s232, 4
      %s234 = scalar_lea.vmem %s0, %s233
      %p235 = scmp.lt.s32.totalorder %s17, 1
      %s236 = scalar_select %p235, %s17, 1
      %s237 = smul.addr %s236, 16
      %s238 = smul.addr %s237, 8
      %s239 = scalar_lea.vmem %s3, %s238
      %p240 = scmp.lt.s32.totalorder %s17, 1
      %s241 = scalar_select %p240, %s17, 1
      %s242 = smul.addr %s241, 2
      %s243 = smul.addr %s242, 8
      %s244 = scalar_lea.vmem %s4, %s243
      %p245 = scmp.lt.s32.totalorder %s17, 1
      %s246 = scalar_select %p245, %s17, 1
      %s247 = smul.addr %s246, 2
      %s248 = smul.addr %s247, 8
      %s249 = scalar_lea.vmem %s5, %s248
      %v251 = vld [vmem:[%s1] sm:$0xf]
      %v252 = vld [vmem:[%s1 + $0x4] sm:$0xf]
      %v253 = vld [vmem:[%s234] sm:$0xff]
      %v254 = vld [vmem:[%s234 + $0x8] sm:$0xff]
      %v255 = vld [vmem:[%s234 + $0x10] sm:$0xff]
      %v256 = vld [vmem:[%s234 + $0x18] sm:$0xff]
      %v257 = vld [vmem:[%s234 + $0x20] sm:$0xff]
      %v258 = vld [vmem:[%s234 + $0x28] sm:$0xff]
      %v259 = vld [vmem:[%s234 + $0x30] sm:$0xff]
      %v260 = vld [vmem:[%s234 + $0x38] sm:$0xff]
      %v261 = vld [vmem:[%s234 + $0x40] sm:$0xff]
      %v262 = vld [vmem:[%s234 + $0x48] sm:$0xff]
      %v263 = vld [vmem:[%s234 + $0x50] sm:$0xff]
      %v264 = vld [vmem:[%s234 + $0x58] sm:$0xff]
      %v265 = vld [vmem:[%s234 + $0x60] sm:$0xff]
      %v266 = vld [vmem:[%s234 + $0x68] sm:$0xff]
      %v267 = vld [vmem:[%s234 + $0x70] sm:$0xff]
      %v268 = vld [vmem:[%s234 + $0x78] sm:$0xff]
      %v269 = vld [vmem:[%s234 + $0x80] sm:$0xff]
      %v270 = vld [vmem:[%s234 + $0x88] sm:$0xff]
      %v271 = vld [vmem:[%s234 + $0x90] sm:$0xff]
      %v272 = vld [vmem:[%s234 + $0x98] sm:$0xff]
      %v273 = vld [vmem:[%s234 + $0xa0] sm:$0xff]
      %v274 = vld [vmem:[%s234 + $0xa8] sm:$0xff]
      %v275 = vld [vmem:[%s234 + $0xb0] sm:$0xff]
      %v276 = vld [vmem:[%s234 + $0xb8] sm:$0xff]
      %v277 = vld [vmem:[%s234 + $0xc0] sm:$0xff]
      %v278 = vld [vmem:[%s234 + $0xc8] sm:$0xff]
      %v279 = vld [vmem:[%s234 + $0xd0] sm:$0xff]
      %v280 = vld [vmem:[%s234 + $0xd8] sm:$0xff]
      %v281 = vld [vmem:[%s234 + $0xe0] sm:$0xff]
      %v282 = vld [vmem:[%s234 + $0xe8] sm:$0xff]
      %v283 = vld [vmem:[%s234 + $0xf0] sm:$0xff]
      %v284 = vld [vmem:[%s234 + $0xf8] sm:$0xff]
      %v285 = vld [vmem:[%s234 + $0x100] sm:$0xff]
      %v286 = vld [vmem:[%s234 + $0x108] sm:$0xff]
      %v287 = vld [vmem:[%s234 + $0x110] sm:$0xff]
      %v288 = vld [vmem:[%s234 + $0x118] sm:$0xff]
      %v289 = vld [vmem:[%s2] sm:$0xff]
      %v290 = vld [vmem:[%s2 + $0x8] sm:$0xff]
      %292 = vset.pattern.permute.xlu0 0
      %293 = vperm.xlu0 %292, %v289
      %v294 = vpop.permute.xlu0 %293
      %297 = vset.pattern.permute.xlu0 0
      %298 = vperm.xlu0 %297, %v290
      %v299 = vpop.permute.xlu0 %298
      %v303 = vunpack.c.l.b16 %v251
      %v304 = vunpack.c.l.b16 %v252
      %v305 = vpack.c.b16 %v304, %v303
      %v342 = vunpack.c.l.b16 %v253
      %v343 = vunpack.c.h.b16 %v253
      %v344 = vunpack.c.l.b16 %v254
      %v345 = vunpack.c.h.b16 %v254
      %v346 = vunpack.c.l.b16 %v255
      %v347 = vunpack.c.h.b16 %v255
      %v348 = vunpack.c.l.b16 %v256
      %v349 = vunpack.c.h.b16 %v256
      %v350 = vunpack.c.l.b16 %v257
      %v351 = vunpack.c.h.b16 %v257
      %v352 = vunpack.c.l.b16 %v258
      %v353 = vunpack.c.h.b16 %v258
      %v354 = vunpack.c.l.b16 %v259
      %v355 = vunpack.c.h.b16 %v259
      %v356 = vunpack.c.l.b16 %v260
      %v357 = vunpack.c.h.b16 %v260
      %v358 = vunpack.c.l.b16 %v261
      %v359 = vunpack.c.h.b16 %v261
      %v360 = vunpack.c.l.b16 %v262
      %v361 = vunpack.c.h.b16 %v262
      %v362 = vunpack.c.l.b16 %v263
      %v363 = vunpack.c.h.b16 %v263
      %v364 = vunpack.c.l.b16 %v264
      %v365 = vunpack.c.h.b16 %v264
      %v366 = vunpack.c.l.b16 %v265
      %v367 = vunpack.c.h.b16 %v265
      %v368 = vunpack.c.l.b16 %v266
      %v369 = vunpack.c.h.b16 %v266
      %v370 = vunpack.c.l.b16 %v267
      %v371 = vunpack.c.h.b16 %v267
      %v372 = vunpack.c.l.b16 %v268
      %v373 = vunpack.c.h.b16 %v268
      %v374 = vunpack.c.l.b16 %v269
      %v375 = vunpack.c.h.b16 %v269
      %v376 = vunpack.c.l.b16 %v270
      %v377 = vunpack.c.h.b16 %v270
      %v378 = vunpack.c.l.b16 %v271
      %v379 = vunpack.c.h.b16 %v271
      %v380 = vunpack.c.l.b16 %v272
      %v381 = vunpack.c.h.b16 %v272
      %v382 = vunpack.c.l.b16 %v273
      %v383 = vunpack.c.h.b16 %v273
      %v384 = vunpack.c.l.b16 %v274
      %v385 = vunpack.c.h.b16 %v274
      %v386 = vunpack.c.l.b16 %v275
      %v387 = vunpack.c.h.b16 %v275
      %v388 = vunpack.c.l.b16 %v276
      %v389 = vunpack.c.h.b16 %v276
      %v390 = vunpack.c.l.b16 %v277
      %v391 = vunpack.c.h.b16 %v277
      %v392 = vunpack.c.l.b16 %v278
      %v393 = vunpack.c.h.b16 %v278
      %v394 = vunpack.c.l.b16 %v279
      %v395 = vunpack.c.h.b16 %v279
      %v396 = vunpack.c.l.b16 %v280
      %v397 = vunpack.c.h.b16 %v280
      %v398 = vunpack.c.l.b16 %v281
      %v399 = vunpack.c.h.b16 %v281
      %v400 = vunpack.c.l.b16 %v282
      %v401 = vunpack.c.h.b16 %v282
      %v402 = vunpack.c.l.b16 %v283
      %v403 = vunpack.c.h.b16 %v283
      %v404 = vunpack.c.l.b16 %v284
      %v405 = vunpack.c.h.b16 %v284
      %v406 = vunpack.c.l.b16 %v285
      %v407 = vunpack.c.h.b16 %v285
      %v408 = vunpack.c.l.b16 %v286
      %v409 = vunpack.c.h.b16 %v286
      %v410 = vunpack.c.l.b16 %v287
      %v411 = vunpack.c.h.b16 %v287
      %v412 = vunpack.c.l.b16 %v288
      %v413 = vunpack.c.h.b16 %v288
      %v414 = vpack.c.b16 %v350, %v342
      %v415 = vpack.c.b16 %v351, %v343
      %v416 = vpack.c.b16 %v352, %v344
      %v417 = vpack.c.b16 %v353, %v345
      %v418 = vpack.c.b16 %v354, %v346
      %v419 = vpack.c.b16 %v355, %v347
      %v420 = vpack.c.b16 %v356, %v348
      %v421 = vpack.c.b16 %v357, %v349
      %v422 = vpack.c.b16 %v366, %v358
      %v423 = vpack.c.b16 %v367, %v359
      %v424 = vpack.c.b16 %v368, %v360
      %v425 = vpack.c.b16 %v369, %v361
      %v426 = vpack.c.b16 %v370, %v362
      %v427 = vpack.c.b16 %v371, %v363
      %v428 = vpack.c.b16 %v372, %v364
      %v429 = vpack.c.b16 %v373, %v365
      %v430 = vpack.c.b16 %v382, %v374
      %v431 = vpack.c.b16 %v383, %v375
      %v432 = vpack.c.b16 %v384, %v376
      %v433 = vpack.c.b16 %v385, %v377
      %v434 = vpack.c.b16 %v386, %v378
      %v435 = vpack.c.b16 %v387, %v379
      %v436 = vpack.c.b16 %v388, %v380
      %v437 = vpack.c.b16 %v389, %v381
      %v438 = vpack.c.b16 %v398, %v390
      %v439 = vpack.c.b16 %v399, %v391
      %v440 = vpack.c.b16 %v400, %v392
      %v441 = vpack.c.b16 %v401, %v393
      %v442 = vpack.c.b16 %v402, %v394
      %v443 = vpack.c.b16 %v403, %v395
      %v444 = vpack.c.b16 %v404, %v396
      %v445 = vpack.c.b16 %v405, %v397
      %v446 = vpack.c.b16 %v406, %v406
      %v447 = vpack.c.b16 %v407, %v407
      %v448 = vpack.c.b16 %v408, %v408
      %v449 = vpack.c.b16 %v409, %v409
      %v450 = vpack.c.b16 %v410, %v410
      %v451 = vpack.c.b16 %v411, %v411
      %v452 = vpack.c.b16 %v412, %v412
      %v453 = vpack.c.b16 %v413, %v413
      %vm486 = vcmask 588800
      %v488 = vsel %vm486, %v305, 0
      %vm490 = vcmask 1043456
      %v492 = vsel %vm490, %v446, 0
      %v495 = vsel %vm490, %v447, 0
      %v498 = vsel %vm490, %v448, 0
      %v501 = vsel %vm490, %v449, 0
      %v504 = vsel %vm490, %v450, 0
      %v507 = vsel %vm490, %v451, 0
      %v510 = vsel %vm490, %v452, 0
      %v513 = vsel %vm490, %v453, 0
      %515 = vmatpush.bf16.msra.mxu0 0
      %516 = vmatpush.bf16.msra.mxu0 0
      %517 = vmatpush.bf16.msra.mxu0 0
      %518 = vmatpush.bf16.msra.mxu0 %v492
      %519 = vmatpush.bf16.msra.mxu0 %v438
      %520 = vmatpush.bf16.msra.mxu0 %v430
      %521 = vmatpush.bf16.msra.mxu0 %v422
      %522 = vmatpush.bf16.msra.mxu0 %v414
      %523 = vmatmul.bf16.gmra.mxu0 %v488
      %v524 = vpop.f32.mrf.mxu0
      %v525 = vadd.f32 %v294, %v524
      %v526 = vpop.f32.mrf.mxu0
      %v527 = vadd.f32 %v299, %v526
      %528 = vdwg.mxu0
      %529 = vmatpush.bf16.msra.mxu0 0
      %530 = vmatpush.bf16.msra.mxu0 0
      %531 = vmatpush.bf16.msra.mxu0 0
      %532 = vmatpush.bf16.msra.mxu0 %v495
      %533 = vmatpush.bf16.msra.mxu0 %v439
      %534 = vmatpush.bf16.msra.mxu0 %v431
      %535 = vmatpush.bf16.msra.mxu0 %v423
      %536 = vmatpush.bf16.msra.mxu0 %v415
      %537 = vmatmul.bf16.gmra.mxu0 %v488
      %v538 = vpop.f32.mrf.mxu0
      %v539 = vadd.f32 %v294, %v538
      %v540 = vpop.f32.mrf.mxu0
      %v541 = vadd.f32 %v299, %v540
      %542 = vdwg.mxu0
      %543 = vmatpush.bf16.msra.mxu0 0
      %544 = vmatpush.bf16.msra.mxu0 0
      %545 = vmatpush.bf16.msra.mxu0 0
      %546 = vmatpush.bf16.msra.mxu0 %v498
      %547 = vmatpush.bf16.msra.mxu0 %v440
      %548 = vmatpush.bf16.msra.mxu0 %v432
      %549 = vmatpush.bf16.msra.mxu0 %v424
      %550 = vmatpush.bf16.msra.mxu0 %v416
      %551 = vmatmul.bf16.gmra.mxu0 %v488
      %v552 = vpop.f32.mrf.mxu0
      %v553 = vadd.f32 %v294, %v552
      %v554 = vpop.f32.mrf.mxu0
      %v555 = vadd.f32 %v299, %v554
      %556 = vdwg.mxu0
      %557 = vmatpush.bf16.msra.mxu0 0
      %558 = vmatpush.bf16.msra.mxu0 0
      %559 = vmatpush.bf16.msra.mxu0 0
      %560 = vmatpush.bf16.msra.mxu0 %v501
      %561 = vmatpush.bf16.msra.mxu0 %v441
      %562 = vmatpush.bf16.msra.mxu0 %v433
      %563 = vmatpush.bf16.msra.mxu0 %v425
      %564 = vmatpush.bf16.msra.mxu0 %v417
      %565 = vmatmul.bf16.gmra.mxu0 %v488
      %v566 = vpop.f32.mrf.mxu0
      %v567 = vadd.f32 %v294, %v566
      %v568 = vpop.f32.mrf.mxu0
      %v569 = vadd.f32 %v299, %v568
      %570 = vdwg.mxu0
      %571 = vmatpush.bf16.msra.mxu0 0
      %572 = vmatpush.bf16.msra.mxu0 0
      %573 = vmatpush.bf16.msra.mxu0 0
      %574 = vmatpush.bf16.msra.mxu0 %v504
      %575 = vmatpush.bf16.msra.mxu0 %v442
      %576 = vmatpush.bf16.msra.mxu0 %v434
      %577 = vmatpush.bf16.msra.mxu0 %v426
      %578 = vmatpush.bf16.msra.mxu0 %v418
      %579 = vmatmul.bf16.gmra.mxu0 %v488
      %v580 = vpop.f32.mrf.mxu0
      %v581 = vadd.f32 %v294, %v580
      %v582 = vpop.f32.mrf.mxu0
      %v583 = vadd.f32 %v299, %v582
      %584 = vdwg.mxu0
      %585 = vmatpush.bf16.msra.mxu0 0
      %586 = vmatpush.bf16.msra.mxu0 0
      %587 = vmatpush.bf16.msra.mxu0 0
      %588 = vmatpush.bf16.msra.mxu0 %v507
      %589 = vmatpush.bf16.msra.mxu0 %v443
      %590 = vmatpush.bf16.msra.mxu0 %v435
      %591 = vmatpush.bf16.msra.mxu0 %v427
      %592 = vmatpush.bf16.msra.mxu0 %v419
      %593 = vmatmul.bf16.gmra.mxu0 %v488
      %v594 = vpop.f32.mrf.mxu0
      %v595 = vadd.f32 %v294, %v594
      %v596 = vpop.f32.mrf.mxu0
      %v597 = vadd.f32 %v299, %v596
      %598 = vdwg.mxu0
      %599 = vmatpush.bf16.msra.mxu0 0
      %600 = vmatpush.bf16.msra.mxu0 0
      %601 = vmatpush.bf16.msra.mxu0 0
      %602 = vmatpush.bf16.msra.mxu0 %v510
      %603 = vmatpush.bf16.msra.mxu0 %v444
      %604 = vmatpush.bf16.msra.mxu0 %v436
      %605 = vmatpush.bf16.msra.mxu0 %v428
      %606 = vmatpush.bf16.msra.mxu0 %v420
      %607 = vmatmul.bf16.gmra.mxu0 %v488
      %v608 = vpop.f32.mrf.mxu0
      %v609 = vadd.f32 %v294, %v608
      %v610 = vpop.f32.mrf.mxu0
      %v611 = vadd.f32 %v299, %v610
      %612 = vdwg.mxu0
      %613 = vmatpush.bf16.msra.mxu0 0
      %614 = vmatpush.bf16.msra.mxu0 0
      %615 = vmatpush.bf16.msra.mxu0 0
      %616 = vmatpush.bf16.msra.mxu0 %v513
      %617 = vmatpush.bf16.msra.mxu0 %v445
      %618 = vmatpush.bf16.msra.mxu0 %v437
      %619 = vmatpush.bf16.msra.mxu0 %v429
      %620 = vmatpush.bf16.msra.mxu0 %v421
      %621 = vmatmul.bf16.gmra.mxu0 %v488
      %v622 = vpop.f32.mrf.mxu0
      %v623 = vadd.f32 %v294, %v622
      %v624 = vpop.f32.mrf.mxu0
      %v625 = vadd.f32 %v299, %v624
      %626 = vdwg.mxu0
      %627 = vst [vmem:[%s239] sm:$0xff] %v525
      %628 = vst [vmem:[%s239 + $0x8] sm:$0xff] %v539
      %629 = vst [vmem:[%s239 + $0x10] sm:$0xff] %v553
      %630 = vst [vmem:[%s239 + $0x18] sm:$0xff] %v567
      %631 = vst [vmem:[%s239 + $0x20] sm:$0xff] %v581
      %632 = vst [vmem:[%s239 + $0x28] sm:$0xff] %v595
      %633 = vst [vmem:[%s239 + $0x30] sm:$0xff] %v609
      %634 = vst [vmem:[%s239 + $0x38] sm:$0xff] %v623
      %635 = vst [vmem:[%s239 + $0x40] sm:$0xff] %v527
      %636 = vst [vmem:[%s239 + $0x48] sm:$0xff] %v541
      %637 = vst [vmem:[%s239 + $0x50] sm:$0xff] %v555
      %638 = vst [vmem:[%s239 + $0x58] sm:$0xff] %v569
      %639 = vst [vmem:[%s239 + $0x60] sm:$0xff] %v583
      %640 = vst [vmem:[%s239 + $0x68] sm:$0xff] %v597
      %641 = vst [vmem:[%s239 + $0x70] sm:$0xff] %v611
      %642 = vst [vmem:[%s239 + $0x78] sm:$0xff] %v625
      %v643 = vadd.f32 %v525, %v539
      %v644 = vadd.f32 %v643, %v553
      %v645 = vadd.f32 %v644, %v567
      %v646 = vadd.f32 %v645, %v581
      %v647 = vadd.f32 %v646, %v595
      %v648 = vadd.f32 %v647, %v609
      %v649 = vadd.f32 %v648, %v623
      %650 = vadd.xlane.f32.xlu0 %v649
      %v651 = vpop.xlane.xlu0 %650
      %v652 = vadd.f32 %v527, %v541
      %v653 = vadd.f32 %v652, %v555
      %v654 = vadd.f32 %v653, %v569
      %v655 = vadd.f32 %v654, %v583
      %v656 = vadd.f32 %v655, %v597
      %v657 = vadd.f32 %v656, %v611
      %v658 = vadd.f32 %v657, %v625
      %659 = vadd.xlane.f32.xlu0 %v658
      %v660 = vpop.xlane.xlu0 %659
      %vm661 = vcmask 7168
      %662 = vst.msk [vmem:[%s244] sm:$0xff] %vm661, %v651
      %663 = vst.msk [vmem:[%s244 + $0x8] sm:$0xff] %vm661, %v660
      %v664 = vmul.f32 %v525, %v525
      %v665 = vmul.f32 %v539, %v539
      %v666 = vmul.f32 %v553, %v553
      %v667 = vmul.f32 %v567, %v567
      %v668 = vmul.f32 %v581, %v581
      %v669 = vmul.f32 %v595, %v595
      %v670 = vmul.f32 %v609, %v609
      %v671 = vmul.f32 %v623, %v623
      %v672 = vmul.f32 %v527, %v527
      %v673 = vmul.f32 %v541, %v541
      %v674 = vmul.f32 %v555, %v555
      %v675 = vmul.f32 %v569, %v569
      %v676 = vmul.f32 %v583, %v583
      %v677 = vmul.f32 %v597, %v597
      %v678 = vmul.f32 %v611, %v611
      %v679 = vmul.f32 %v625, %v625
      %v680 = vadd.f32 %v664, %v665
      %v681 = vadd.f32 %v680, %v666
      %v682 = vadd.f32 %v681, %v667
      %v683 = vadd.f32 %v682, %v668
      %v684 = vadd.f32 %v683, %v669
      %v685 = vadd.f32 %v684, %v670
      %v686 = vadd.f32 %v685, %v671
      %687 = vadd.xlane.f32.xlu0 %v686
      %v688 = vpop.xlane.xlu0 %687
      %v689 = vadd.f32 %v672, %v673
      %v690 = vadd.f32 %v689, %v674
      %v691 = vadd.f32 %v690, %v675
      %v692 = vadd.f32 %v691, %v676
      %v693 = vadd.f32 %v692, %v677
      %v694 = vadd.f32 %v693, %v678
      %v695 = vadd.f32 %v694, %v679
      %696 = vadd.xlane.f32.xlu0 %v695
      %v697 = vpop.xlane.xlu0 %696
      %698 = vst.msk [vmem:[%s249] sm:$0xff] %vm661, %v688
      %699 = vst.msk [vmem:[%s249 + $0x8] sm:$0xff] %vm661, %v697
      %p700 = scmp.lt.s32.totalorder %s17, 1
      %s701 = scalar_select %p700, %s17, 1
      %s702 = smul.addr %s701, 16
      %s703 = smul.addr %s702, 8
      %s704 = scalar_lea.vmem %s3, %s703
      %p705 = scmp.lt.s32.totalorder %s17, 1
      %s706 = scalar_select %p705, %s17, 1
      %s707 = smul.addr %s706, 2
      %s708 = smul.addr %s707, 8
      %s709 = scalar_lea.vmem %s4, %s708
      %p710 = scmp.lt.s32.totalorder %s17, 1
      %s711 = scalar_select %p710, %s17, 1
      %s712 = smul.addr %s711, 2
      %s713 = smul.addr %s712, 8
      %s714 = scalar_lea.vmem %s5, %s713
      // Predicated region
      $region33: #{decoder_block_forward.4} parent=31 // pred_check
        %p715 = pneg %p103
      $region34: #{decoder_block_forward.4} parent=31 // pred_check_branch
        %717 = sbr.rel (%p715) target = $region36
      $region35: #{decoder_block_forward.4} parent=31 // pred_region
        _
      $region36: #{decoder_block_forward.4} parent=31 // pred_fallthru
        _
      // Predicated region
      $region37: #{decoder_block_forward.4} parent=31 // pred_check
        %p718 = pneg %p129
      $region38: #{decoder_block_forward.4} parent=31 // pred_check_branch
        %720 = sbr.rel (%p718) target = $region40
      $region39: #{decoder_block_forward.4} parent=31 // pred_region
        _
      $region40: #{decoder_block_forward.4} parent=31 // pred_fallthru
        _
      // Predicated region
      $region41: #{decoder_block_forward.4} parent=31 // pred_check
        %p721 = pneg %p155
      $region42: #{decoder_block_forward.4} parent=31 // pred_check_branch
        %723 = sbr.rel (%p721) target = $region44
      $region43: #{decoder_block_forward.4} parent=31 // pred_region
        _
      $region44: #{decoder_block_forward.4} parent=31 // pred_fallthru
        _
    $region32: #{decoder_block_forward.4} parent=5 // pred_fallthru
      _
    %p724 = scmp.le.s32.totalorder 2, %s12
    // Predicated region
    $region45: #{decoder_block_forward.4} parent=5 // pred_check
      %p725 = pneg %p724
    $region46: #{decoder_block_forward.4} parent=5 // pred_check_branch
      %727 = sbr.rel (%p725) target = $region48
    $region47: #{decoder_block_forward.4} parent=5 // pred_region
      %s728 = ssub.s32 %s12, 2
      // Predicated region
      $region49: #{decoder_block_forward.4} parent=47 // pred_check
        %p729 = pneg %p109
      $region50: #{decoder_block_forward.4} parent=47 // pred_check_branch
        %731 = sbr.rel (%p729) target = $region52
      $region51: #{decoder_block_forward.4} parent=47 // pred_region
        %p732 = scmp.lt.s32.totalorder %s18, 1
        %s733 = scalar_select %p732, %s18, 1
        %s734 = smul.addr %s733, 16
        %s735 = smul.addr %s734, 8
        %s736 = scalar_lea.vmem %s3, %s735
      $region52: #{decoder_block_forward.4} parent=47 // pred_fallthru
        _
      // Predicated region
      $region53: #{decoder_block_forward.4} parent=47 // pred_check
        %p737 = pneg %p135
      $region54: #{decoder_block_forward.4} parent=47 // pred_check_branch
        %739 = sbr.rel (%p737) target = $region56
      $region55: #{decoder_block_forward.4} parent=47 // pred_region
        %p740 = scmp.lt.s32.totalorder %s18, 1
        %s741 = scalar_select %p740, %s18, 1
        %s742 = smul.addr %s741, 2
        %s743 = smul.addr %s742, 8
        %s744 = scalar_lea.vmem %s4, %s743
      $region56: #{decoder_block_forward.4} parent=47 // pred_fallthru
        _
      // Predicated region
      $region57: #{decoder_block_forward.4} parent=47 // pred_check
        %p745 = pneg %p161
      $region58: #{decoder_block_forward.4} parent=47 // pred_check_branch
        %747 = sbr.rel (%p745) target = $region60
      $region59: #{decoder_block_forward.4} parent=47 // pred_region
        %p748 = scmp.lt.s32.totalorder %s18, 1
        %s749 = scalar_select %p748, %s18, 1
        %s750 = smul.addr %s749, 2
        %s751 = smul.addr %s750, 8
        %s752 = scalar_lea.vmem %s5, %s751
      $region60: #{decoder_block_forward.4} parent=47 // pred_fallthru
        _
    $region48: #{decoder_block_forward.4} parent=5 // pred_fallthru
      _
  $region6: #{decoder_block_forward.4} parent=0 // loop_footer
    %s16 = sadd.s32 1, %s12
  $region7: #{decoder_block_forward.4} parent=0 // loop_footer_branch
    %11 = sbr.rel target = $region3
  $region8: #{decoder_block_forward.4} parent=0 // loop_exit
    _

// kernel: decoder_block_forward.6
$region0: #{decoder_block_forward.6}
  #allocation0 [shape = 'u32[]', space=smem, size = 0x4, offset = 0x4, fixed_abs, tag = 'smem constant byte address 0x4 - core index']
  #allocation1 [shape = 'u32[72,128]{1,0:T(1,128)}', space=vmem, size = 0x9000, scoped, tag = 'internal scratch']
  %s0 = inlined_call_operand.vmem [shape: bf16[2,144,1024], index: 0, kind: input, shape index: {}]
  %s1 = inlined_call_operand.vmem [shape: bf16[16,144], index: 1, kind: input, shape index: {}]
  %s2 = inlined_call_operand.vmem [shape: f32[16,1], index: 2, kind: input, shape index: {}]
  %s3 = inlined_call_operand.vmem [shape: f32[2,16,1024], index: 3, kind: output, shape index: {0}]
  %s4 = inlined_call_operand.vmem [shape: f32[2,16,1], index: 4, kind: output, shape index: {1}]
  %s5 = inlined_call_operand.vmem [shape: f32[2,16,1], index: 5, kind: output, shape index: {2}]
  %6 = xla_tuple %s3, %s4, %s5
  %s7 = sld [smem:[#allocation0]]
  $region61: #{decoder_block_forward.6} parent=0
    _
  %s9 = ssub.s32 1, %s7
  %s10 = scalar_select 0, %s9, %s7
  loop: start=0, step=1, limit=4
  $region2: #{decoder_block_forward.6} parent=0 // loop_pre_header
    _
  $region3: #{decoder_block_forward.6} parent=0 // loop_header
    %s12 = sphi 0, %s16
    %p13 = scmp.ge.s32.totalorder %s12, 4
    %s22 = sphi 0, %s24
    %s25 = sphi 0, %s22
    %s26 = sphi 0, %s25
    %s42 = sphi 0, %s26
    %s46 = sphi 0, %s46
    %s48 = sphi 0, %s46
    %s49 = sphi 0, %s48
    %s63 = sphi 0, %s49
    %s67 = sphi 0, %s67
    %s69 = sphi 0, %s67
    %s70 = sphi 0, %s69
    %s84 = sphi 0, %s70
    %s90 = sphi 0, %s92
    %s93 = sphi 0, %s90
    %s94 = sphi 0, %s93
    %s110 = sphi 0, %s94
    %s116 = sphi 0, %s118
    %s119 = sphi 0, %s116
    %s120 = sphi 0, %s119
    %s136 = sphi 0, %s120
    %s142 = sphi 0, %s144
    %s145 = sphi 0, %s142
    %s146 = sphi 0, %s145
    %s162 = sphi 0, %s146
  $region4: #{decoder_block_forward.6} parent=0 // loop_header_branch
    %15 = sbr.rel (%p13) target = $region8
  $region5: #{decoder_block_forward.6} parent=0 // loop_body
    %s17 = ssub.s32 %s12, 1
    %s18 = ssub.s32 %s12, 2
    %s19 = sadd.s32 %s12, 1
    %s20 = ssub.s32 %s12, %s19
    %p21 = scmp.eq.s32.totalorder %s20, 0
    %s23 = sadd.s32 %s22, 1
    %s24 = scalar_select %p21, %s22, %s23
    %p27 = pneg %p21
    %p28 = scmp.eq.s32.totalorder %s12, 1
    %p29 = por %p27, %p28
    %p30 = scmp.ne.s32.totalorder %s22, %s25
    %p31 = scmp.eq.s32.totalorder %s12, 0
    %p32 = por %p30, %p31
    %p33 = scmp.ne.s32.totalorder %s22, %s25
    %p34 = scmp.eq.s32.totalorder %s17, 1
    %p35 = por %p33, %p34
    %p36 = scmp.ne.s32.totalorder %s25, %s26
    %p37 = scmp.eq.s32.totalorder %s17, 0
    %p38 = por %p36, %p37
    %p39 = scmp.ne.s32.totalorder %s25, %s26
    %p40 = scmp.eq.s32.totalorder %s18, 1
    %p41 = por %p39, %p40
    %p43 = scmp.ne.s32.totalorder %s26, %s42
    %p44 = scmp.eq.s32.totalorder %s18, 0
    %p45 = por %p43, %p44
    %s47 = sadd.s32 %s46, 1
    %p50 = scmp.eq.s32.totalorder %s12, 1
    %p51 = scmp.ne.s32.totalorder %s46, %s48
    %p52 = scmp.eq.s32.totalorder %s12, 0
    %p53 = por %p51, %p52
    %p54 = scmp.ne.s32.totalorder %s46, %s48
    %p55 = scmp.eq.s32.totalorder %s17, 1
    %p56 = por %p54, %p55
    %p57 = scmp.ne.s32.totalorder %s48, %s49
    %p58 = scmp.eq.s32.totalorder %s17, 0
    %p59 = por %p57, %p58
    %p60 = scmp.ne.s32.totalorder %s48, %s49
    %p61 = scmp.eq.s32.totalorder %s18, 1
    %p62 = por %p60, %p61
    %p64 = scmp.ne.s32.totalorder %s49, %s63
    %p65 = scmp.eq.s32.totalorder %s18, 0
    %p66 = por %p64, %p65
    %s68 = sadd.s32 %s67, 1
    %p71 = scmp.eq.s32.totalorder %s12, 1
    %p72 = scmp.ne.s32.totalorder %s67, %s69
    %p73 = scmp.eq.s32.totalorder %s12, 0
    %p74 = por %p72, %p73
    %p75 = scmp.ne.s32.totalorder %s67, %s69
    %p76 = scmp.eq.s32.totalorder %s17, 1
    %p77 = por %p75, %p76
    %p78 = scmp.ne.s32.totalorder %s69, %s70
    %p79 = scmp.eq.s32.totalorder %s17, 0
    %p80 = por %p78, %p79
    %p81 = scmp.ne.s32.totalorder %s69, %s70
    %p82 = scmp.eq.s32.totalorder %s18, 1
    %p83 = por %p81, %p82
    %p85 = scmp.ne.s32.totalorder %s70, %s84
    %p86 = scmp.eq.s32.totalorder %s18, 0
    %p87 = por %p85, %p86
    %s88 = ssub.s32 %s12, %s19
    %p89 = scmp.eq.s32.totalorder %s88, 0
    %s91 = sadd.s32 %s90, 1
    %s92 = scalar_select %p89, %s90, %s91
    %p95 = pneg %p89
    %p96 = scmp.eq.s32.totalorder %s12, 1
    %p97 = por %p95, %p96
    %p98 = scmp.ne.s32.totalorder %s90, %s93
    %p99 = scmp.eq.s32.totalorder %s12, 0
    %p100 = por %p98, %p99
    %p101 = scmp.ne.s32.totalorder %s90, %s93
    %p102 = scmp.eq.s32.totalorder %s17, 1
    %p103 = por %p101, %p102
    %p104 = scmp.ne.s32.totalorder %s93, %s94
    %p105 = scmp.eq.s32.totalorder %s17, 0
    %p106 = por %p104, %p105
    %p107 = scmp.ne.s32.totalorder %s93, %s94
    %p108 = scmp.eq.s32.totalorder %s18, 1
    %p109 = por %p107, %p108
    %p111 = scmp.ne.s32.totalorder %s94, %s110
    %p112 = scmp.eq.s32.totalorder %s18, 0
    %p113 = por %p111, %p112
    %s114 = ssub.s32 %s12, %s19
    %p115 = scmp.eq.s32.totalorder %s114, 0
    %s117 = sadd.s32 %s116, 1
    %s118 = scalar_select %p115, %s116, %s117
    %p121 = pneg %p115
    %p122 = scmp.eq.s32.totalorder %s12, 1
    %p123 = por %p121, %p122
    %p124 = scmp.ne.s32.totalorder %s116, %s119
    %p125 = scmp.eq.s32.totalorder %s12, 0
    %p126 = por %p124, %p125
    %p127 = scmp.ne.s32.totalorder %s116, %s119
    %p128 = scmp.eq.s32.totalorder %s17, 1
    %p129 = por %p127, %p128
    %p130 = scmp.ne.s32.totalorder %s119, %s120
    %p131 = scmp.eq.s32.totalorder %s17, 0
    %p132 = por %p130, %p131
    %p133 = scmp.ne.s32.totalorder %s119, %s120
    %p134 = scmp.eq.s32.totalorder %s18, 1
    %p135 = por %p133, %p134
    %p137 = scmp.ne.s32.totalorder %s120, %s136
    %p138 = scmp.eq.s32.totalorder %s18, 0
    %p139 = por %p137, %p138
    %s140 = ssub.s32 %s12, %s19
    %p141 = scmp.eq.s32.totalorder %s140, 0
    %s143 = sadd.s32 %s142, 1
    %s144 = scalar_select %p141, %s142, %s143
    %p147 = pneg %p141
    %p148 = scmp.eq.s32.totalorder %s12, 1
    %p149 = por %p147, %p148
    %p150 = scmp.ne.s32.totalorder %s142, %s145
    %p151 = scmp.eq.s32.totalorder %s12, 0
    %p152 = por %p150, %p151
    %p153 = scmp.ne.s32.totalorder %s142, %s145
    %p154 = scmp.eq.s32.totalorder %s17, 1
    %p155 = por %p153, %p154
    %p156 = scmp.ne.s32.totalorder %s145, %s146
    %p157 = scmp.eq.s32.totalorder %s17, 0
    %p158 = por %p156, %p157
    %p159 = scmp.ne.s32.totalorder %s145, %s146
    %p160 = scmp.eq.s32.totalorder %s18, 1
    %p161 = por %p159, %p160
    %p163 = scmp.ne.s32.totalorder %s146, %s162
    %p164 = scmp.eq.s32.totalorder %s18, 0
    %p165 = por %p163, %p164
    %p166 = scmp.le.s32.totalorder 1, %s12
    %p167 = scmp.lt.s32.totalorder %s12, 3
    %p168 = pnand %p166, %p167
    %p169 = pneg %p168
    // Predicated region
    $region9: #{decoder_block_forward.6} parent=5 // pred_check
      _
    $region10: #{decoder_block_forward.6} parent=5 // pred_check_branch
      %171 = sbr.rel (%p168) target = $region12
    $region11: #{decoder_block_forward.6} parent=5 // pred_region
      %s172 = ssub.s32 %s12, 1
      // Predicated region
      $region13: #{decoder_block_forward.6} parent=11 // pred_check
        %p173 = pneg %p59
      $region14: #{decoder_block_forward.6} parent=11 // pred_check_branch
        %175 = sbr.rel (%p173) target = $region16
      $region15: #{decoder_block_forward.6} parent=11 // pred_region
        _
      $region16: #{decoder_block_forward.6} parent=11 // pred_fallthru
        _
      // Predicated region
      $region17: #{decoder_block_forward.6} parent=11 // pred_check
        %p176 = pneg %p80
      $region18: #{decoder_block_forward.6} parent=11 // pred_check_branch
        %178 = sbr.rel (%p176) target = $region20
      $region19: #{decoder_block_forward.6} parent=11 // pred_region
        _
      $region20: #{decoder_block_forward.6} parent=11 // pred_fallthru
        _
    $region12: #{decoder_block_forward.6} parent=5 // pred_fallthru
      _
    %p179 = scmp.lt.s32.totalorder %s12, 2
    // Predicated region
    $region21: #{decoder_block_forward.6} parent=5 // pred_check
      %p180 = pneg %p179
    $region22: #{decoder_block_forward.6} parent=5 // pred_check_branch
      %182 = sbr.rel (%p180) target = $region24
    $region23: #{decoder_block_forward.6} parent=5 // pred_region
      // Predicated region
      $region25: #{decoder_block_forward.6} parent=23 // pred_check
        %p183 = pneg %p32
      $region26: #{decoder_block_forward.6} parent=23 // pred_check_branch
        %185 = sbr.rel (%p183) target = $region28
      $region27: #{decoder_block_forward.6} parent=23 // pred_region
        %p186 = scmp.lt.s32.totalorder %s12, 1
        %s187 = scalar_select %p186, %s12, 1
        %s188 = smul.addr %s187, 144
        %s189 = smul.addr %s188, 4
        %s190 = scalar_lea.vmem %s0, %s189
      $region28: #{decoder_block_forward.6} parent=23 // pred_fallthru
        _
    $region24: #{decoder_block_forward.6} parent=5 // pred_fallthru
      _
    %p191 = scmp.le.s32.totalorder 1, %s12
    %p192 = scmp.lt.s32.totalorder %s12, 3
    %p193 = pnand %p191, %p192
    %p194 = pneg %p193
    // Predicated region
    $region29: #{decoder_block_forward.6} parent=5 // pred_check
      _
    $region30: #{decoder_block_forward.6} parent=5 // pred_check_branch
      %196 = sbr.rel (%p193) target = $region32
    $region31: #{decoder_block_forward.6} parent=5 // pred_region
      %s197 = ssub.s32 %s12, 1
      %p198 = scmp.lt.s32.totalorder %s17, 1
      %s199 = scalar_select %p198, %s17, 1
      %s200 = smul.addr %s199, 144
      %s201 = smul.addr %s200, 4
      %s202 = scalar_lea.vmem %s0, %s201
      %p203 = pneg %p38
      %p204 = pneg %p35
      %p205 = pneg %p59
      %p206 = pneg %p56
      %p207 = pneg %p80
      %p208 = pneg %p77
      %p209 = pneg %p106
      %p210 = pneg %p103
      %p211 = scmp.lt.s32.totalorder %s17, 1
      %s212 = scalar_select %p211, %s17, 1
      %s213 = smul.addr %s212, 16
      %s214 = smul.addr %s213, 8
      %s215 = scalar_lea.vmem %s3, %s214
      %p216 = pneg %p132
      %p217 = pneg %p129
      %p218 = scmp.lt.s32.totalorder %s17, 1
      %s219 = scalar_select %p218, %s17, 1
      %s220 = smul.addr %s219, 2
      %s221 = smul.addr %s220, 8
      %s222 = scalar_lea.vmem %s4, %s221
      %p223 = pneg %p158
      %p224 = pneg %p155
      %p225 = scmp.lt.s32.totalorder %s17, 1
      %s226 = scalar_select %p225, %s17, 1
      %s227 = smul.addr %s226, 2
      %s228 = smul.addr %s227, 8
      %s229 = scalar_lea.vmem %s5, %s228
      %p230 = scmp.lt.s32.totalorder %s17, 1
      %s231 = scalar_select %p230, %s17, 1
      %s232 = smul.addr %s231, 144
      %s233 = smul.addr %s232, 4
      %s234 = scalar_lea.vmem %s0, %s233
      %p235 = scmp.lt.s32.totalorder %s17, 1
      %s236 = scalar_select %p235, %s17, 1
      %s237 = smul.addr %s236, 16
      %s238 = smul.addr %s237, 8
      %s239 = scalar_lea.vmem %s3, %s238
      %p240 = scmp.lt.s32.totalorder %s17, 1
      %s241 = scalar_select %p240, %s17, 1
      %s242 = smul.addr %s241, 2
      %s243 = smul.addr %s242, 8
      %s244 = scalar_lea.vmem %s4, %s243
      %p245 = scmp.lt.s32.totalorder %s17, 1
      %s246 = scalar_select %p245, %s17, 1
      %s247 = smul.addr %s246, 2
      %s248 = smul.addr %s247, 8
      %s249 = scalar_lea.vmem %s5, %s248
      %v251 = vld [vmem:[%s1] sm:$0xff]
      %v252 = vld [vmem:[%s1 + $0x8] sm:$0xff]
      %v253 = vld [vmem:[%s234] sm:$0xff]
      %v254 = vld [vmem:[%s234 + $0x8] sm:$0xff]
      %v255 = vld [vmem:[%s234 + $0x10] sm:$0xff]
      %v256 = vld [vmem:[%s234 + $0x18] sm:$0xff]
      %v257 = vld [vmem:[%s234 + $0x20] sm:$0xff]
      %v258 = vld [vmem:[%s234 + $0x28] sm:$0xff]
      %v259 = vld [vmem:[%s234 + $0x30] sm:$0xff]
      %v260 = vld [vmem:[%s234 + $0x38] sm:$0xff]
      %v261 = vld [vmem:[%s234 + $0x40] sm:$0xff]
      %v262 = vld [vmem:[%s234 + $0x48] sm:$0xff]
      %v263 = vld [vmem:[%s234 + $0x50] sm:$0xff]
      %v264 = vld [vmem:[%s234 + $0x58] sm:$0xff]
      %v265 = vld [vmem:[%s234 + $0x60] sm:$0xff]
      %v266 = vld [vmem:[%s234 + $0x68] sm:$0xff]
      %v267 = vld [vmem:[%s234 + $0x70] sm:$0xff]
      %v268 = vld [vmem:[%s234 + $0x78] sm:$0xff]
      %v269 = vld [vmem:[%s234 + $0x80] sm:$0xff]
      %v270 = vld [vmem:[%s234 + $0x88] sm:$0xff]
      %v271 = vld [vmem:[%s234 + $0x90] sm:$0xff]
      %v272 = vld [vmem:[%s234 + $0x98] sm:$0xff]
      %v273 = vld [vmem:[%s234 + $0xa0] sm:$0xff]
      %v274 = vld [vmem:[%s234 + $0xa8] sm:$0xff]
      %v275 = vld [vmem:[%s234 + $0xb0] sm:$0xff]
      %v276 = vld [vmem:[%s234 + $0xb8] sm:$0xff]
      %v277 = vld [vmem:[%s234 + $0xc0] sm:$0xff]
      %v278 = vld [vmem:[%s234 + $0xc8] sm:$0xff]
      %v279 = vld [vmem:[%s234 + $0xd0] sm:$0xff]
      %v280 = vld [vmem:[%s234 + $0xd8] sm:$0xff]
      %v281 = vld [vmem:[%s234 + $0xe0] sm:$0xff]
      %v282 = vld [vmem:[%s234 + $0xe8] sm:$0xff]
      %v283 = vld [vmem:[%s234 + $0xf0] sm:$0xff]
      %v284 = vld [vmem:[%s234 + $0xf8] sm:$0xff]
      %v285 = vld [vmem:[%s234 + $0x100] sm:$0xff]
      %v286 = vld [vmem:[%s234 + $0x108] sm:$0xff]
      %v287 = vld [vmem:[%s234 + $0x110] sm:$0xff]
      %v288 = vld [vmem:[%s234 + $0x118] sm:$0xff]
      %v289 = vld [vmem:[%s234 + $0x120] sm:$0xff]
      %v290 = vld [vmem:[%s234 + $0x128] sm:$0xff]
      %v291 = vld [vmem:[%s234 + $0x130] sm:$0xff]
      %v292 = vld [vmem:[%s234 + $0x138] sm:$0xff]
      %v293 = vld [vmem:[%s234 + $0x140] sm:$0xff]
      %v294 = vld [vmem:[%s234 + $0x148] sm:$0xff]
      %v295 = vld [vmem:[%s234 + $0x150] sm:$0xff]
      %v296 = vld [vmem:[%s234 + $0x158] sm:$0xff]
      %v297 = vld [vmem:[%s234 + $0x160] sm:$0xff]
      %v298 = vld [vmem:[%s234 + $0x168] sm:$0xff]
      %v299 = vld [vmem:[%s234 + $0x170] sm:$0xff]
      %v300 = vld [vmem:[%s234 + $0x178] sm:$0xff]
      %v301 = vld [vmem:[%s234 + $0x180] sm:$0xff]
      %v302 = vld [vmem:[%s234 + $0x188] sm:$0xff]
      %v303 = vld [vmem:[%s234 + $0x190] sm:$0xff]
      %v304 = vld [vmem:[%s234 + $0x198] sm:$0xff]
      %v305 = vld [vmem:[%s234 + $0x1a0] sm:$0xff]
      %v306 = vld [vmem:[%s234 + $0x1a8] sm:$0xff]
      %v307 = vld [vmem:[%s234 + $0x1b0] sm:$0xff]
      %v308 = vld [vmem:[%s234 + $0x1b8] sm:$0xff]
      %v309 = vld [vmem:[%s234 + $0x1c0] sm:$0xff]
      %v310 = vld [vmem:[%s234 + $0x1c8] sm:$0xff]
      %v311 = vld [vmem:[%s234 + $0x1d0] sm:$0xff]
      %v312 = vld [vmem:[%s234 + $0x1d8] sm:$0xff]
      %v313 = vld [vmem:[%s234 + $0x1e0] sm:$0xff]
      %v314 = vld [vmem:[%s234 + $0x1e8] sm:$0xff]
      %v315 = vld [vmem:[%s234 + $0x1f0] sm:$0xff]
      %v316 = vld [vmem:[%s234 + $0x1f8] sm:$0xff]
      %v317 = vld [vmem:[%s234 + $0x200] sm:$0xff]
      %v318 = vld [vmem:[%s234 + $0x208] sm:$0xff]
      %v319 = vld [vmem:[%s234 + $0x210] sm:$0xff]
      %v320 = vld [vmem:[%s234 + $0x218] sm:$0xff]
      %v321 = vld [vmem:[%s234 + $0x220] sm:$0xff]
      %v322 = vld [vmem:[%s234 + $0x228] sm:$0xff]
      %v323 = vld [vmem:[%s234 + $0x230] sm:$0xff]
      %v324 = vld [vmem:[%s234 + $0x238] sm:$0xff]
      %v325 = vld [vmem:[%s2] sm:$0xff]
      %v326 = vld [vmem:[%s2 + $0x8] sm:$0xff]
      %328 = vset.pattern.permute.xlu0 0
      %329 = vperm.xlu0 %328, %v325
      %v330 = vpop.permute.xlu0 %329
      %333 = vset.pattern.permute.xlu0 0
      %334 = vperm.xlu0 %333, %v326
      %v335 = vpop.permute.xlu0 %334
      %v339 = vunpack.c.l.b16 %v251
      %v340 = vunpack.c.h.b16 %v251
      %v341 = vunpack.c.l.b16 %v252
      %v342 = vunpack.c.h.b16 %v252
      %v343 = vpack.c.b16 %v341, %v339
      %v344 = vpack.c.b16 %v342, %v340
      %v418 = vunpack.c.l.b16 %v253
      %v419 = vunpack.c.h.b16 %v253
      %v420 = vunpack.c.l.b16 %v254
      %v421 = vunpack.c.h.b16 %v254
      %v422 = vunpack.c.l.b16 %v255
      %v423 = vunpack.c.h.b16 %v255
      %v424 = vunpack.c.l.b16 %v256
      %v425 = vunpack.c.h.b16 %v256
      %v426 = vunpack.c.l.b16 %v257
      %v427 = vunpack.c.h.b16 %v257
      %v428 = vunpack.c.l.b16 %v258
      %v429 = vunpack.c.h.b16 %v258
      %v430 = vunpack.c.l.b16 %v259
      %v431 = vunpack.c.h.b16 %v259
      %v432 = vunpack.c.l.b16 %v260
      %v433 = vunpack.c.h.b16 %v260
      %v434 = vunpack.c.l.b16 %v261
      %v435 = vunpack.c.h.b16 %v261
      %v436 = vunpack.c.l.b16 %v262
      %v437 = vunpack.c.h.b16 %v262
      %v438 = vunpack.c.l.b16 %v263
      %v439 = vunpack.c.h.b16 %v263
      %v440 = vunpack.c.l.b16 %v264
      %v441 = vunpack.c.h.b16 %v264
      %v442 = vunpack.c.l.b16 %v265
      %v443 = vunpack.c.h.b16 %v265
      %v444 = vunpack.c.l.b16 %v266
      %v445 = vunpack.c.h.b16 %v266
      %v446 = vunpack.c.l.b16 %v267
      %v447 = vunpack.c.h.b16 %v267
      %v448 = vunpack.c.l.b16 %v268
      %v449 = vunpack.c.h.b16 %v268
      %v450 = vunpack.c.l.b16 %v269
      %v451 = vunpack.c.h.b16 %v269
      %v452 = vunpack.c.l.b16 %v270
      %v453 = vunpack.c.h.b16 %v270
      %v454 = vunpack.c.l.b16 %v271
      %v455 = vunpack.c.h.b16 %v271
      %v456 = vunpack.c.l.b16 %v272
      %v457 = vunpack.c.h.b16 %v272
      %v458 = vunpack.c.l.b16 %v273
      %v459 = vunpack.c.h.b16 %v273
      %v460 = vunpack.c.l.b16 %v274
      %v461 = vunpack.c.h.b16 %v274
      %v462 = vunpack.c.l.b16 %v275
      %v463 = vunpack.c.h.b16 %v275
      %v464 = vunpack.c.l.b16 %v276
      %v465 = vunpack.c.h.b16 %v276
      %v466 = vunpack.c.l.b16 %v277
      %v467 = vunpack.c.h.b16 %v277
      %v468 = vunpack.c.l.b16 %v278
      %v469 = vunpack.c.h.b16 %v278
      %v470 = vunpack.c.l.b16 %v279
      %v471 = vunpack.c.h.b16 %v279
      %v472 = vunpack.c.l.b16 %v280
      %v473 = vunpack.c.h.b16 %v280
      %v474 = vunpack.c.l.b16 %v281
      %v475 = vunpack.c.h.b16 %v281
      %v476 = vunpack.c.l.b16 %v282
      %v477 = vunpack.c.h.b16 %v282
      %v478 = vunpack.c.l.b16 %v283
      %v479 = vunpack.c.h.b16 %v283
      %v480 = vunpack.c.l.b16 %v284
      %v481 = vunpack.c.h.b16 %v284
      %v482 = vunpack.c.l.b16 %v285
      %v483 = vunpack.c.h.b16 %v285
      %v484 = vunpack.c.l.b16 %v286
      %v485 = vunpack.c.h.b16 %v286
      %v486 = vunpack.c.l.b16 %v287
      %v487 = vunpack.c.h.b16 %v287
      %v488 = vunpack.c.l.b16 %v288
      %v489 = vunpack.c.h.b16 %v288
      %v490 = vunpack.c.l.b16 %v289
      %v491 = vunpack.c.h.b16 %v289
      %v492 = vunpack.c.l.b16 %v290
      %v493 = vunpack.c.h.b16 %v290
      %v494 = vunpack.c.l.b16 %v291
      %v495 = vunpack.c.h.b16 %v291
      %v496 = vunpack.c.l.b16 %v292
      %v497 = vunpack.c.h.b16 %v292
      %v498 = vunpack.c.l.b16 %v293
      %v499 = vunpack.c.h.b16 %v293
      %v500 = vunpack.c.l.b16 %v294
      %v501 = vunpack.c.h.b16 %v294
      %v502 = vunpack.c.l.b16 %v295
      %v503 = vunpack.c.h.b16 %v295
      %v504 = vunpack.c.l.b16 %v296
      %v505 = vunpack.c.h.b16 %v296
      %v506 = vunpack.c.l.b16 %v297
      %v507 = vunpack.c.h.b16 %v297
      %v508 = vunpack.c.l.b16 %v298
      %v509 = vunpack.c.h.b16 %v298
      %v510 = vunpack.c.l.b16 %v299
      %v511 = vunpack.c.h.b16 %v299
      %v512 = vunpack.c.l.b16 %v300
      %v513 = vunpack.c.h.b16 %v300
      %v514 = vunpack.c.l.b16 %v301
      %v515 = vunpack.c.h.b16 %v301
      %v516 = vunpack.c.l.b16 %v302
      %v517 = vunpack.c.h.b16 %v302
      %v518 = vunpack.c.l.b16 %v303
      %v519 = vunpack.c.h.b16 %v303
      %v520 = vunpack.c.l.b16 %v304
      %v521 = vunpack.c.h.b16 %v304
      %v522 = vunpack.c.l.b16 %v305
      %v523 = vunpack.c.h.b16 %v305
      %v524 = vunpack.c.l.b16 %v306
      %v525 = vunpack.c.h.b16 %v306
      %v526 = vunpack.c.l.b16 %v307
      %v527 = vunpack.c.h.b16 %v307
      %v528 = vunpack.c.l.b16 %v308
      %v529 = vunpack.c.h.b16 %v308
      %v530 = vunpack.c.l.b16 %v309
      %v531 = vunpack.c.h.b16 %v309
      %v532 = vunpack.c.l.b16 %v310
      %v533 = vunpack.c.h.b16 %v310
      %v534 = vunpack.c.l.b16 %v311
      %v535 = vunpack.c.h.b16 %v311
      %v536 = vunpack.c.l.b16 %v312
      %v537 = vunpack.c.h.b16 %v312
      %v538 = vunpack.c.l.b16 %v313
      %v539 = vunpack.c.h.b16 %v313
      %v540 = vunpack.c.l.b16 %v314
      %v541 = vunpack.c.h.b16 %v314
      %v542 = vunpack.c.l.b16 %v315
      %v543 = vunpack.c.h.b16 %v315
      %v544 = vunpack.c.l.b16 %v316
      %v545 = vunpack.c.h.b16 %v316
      %v546 = vunpack.c.l.b16 %v317
      %v547 = vunpack.c.h.b16 %v317
      %v548 = vunpack.c.l.b16 %v318
      %v549 = vunpack.c.h.b16 %v318
      %v550 = vunpack.c.l.b16 %v319
      %v551 = vunpack.c.h.b16 %v319
      %v552 = vunpack.c.l.b16 %v320
      %v553 = vunpack.c.h.b16 %v320
      %v554 = vunpack.c.l.b16 %v321
      %v555 = vunpack.c.h.b16 %v321
      %v556 = vunpack.c.l.b16 %v322
      %v557 = vunpack.c.h.b16 %v322
      %v558 = vunpack.c.l.b16 %v323
      %v559 = vunpack.c.h.b16 %v323
      %v560 = vunpack.c.l.b16 %v324
      %v561 = vunpack.c.h.b16 %v324
      %v562 = vpack.c.b16 %v426, %v418
      %v563 = vpack.c.b16 %v427, %v419
      %v564 = vpack.c.b16 %v428, %v420
      %v565 = vpack.c.b16 %v429, %v421
      %v566 = vpack.c.b16 %v430, %v422
      %v567 = vpack.c.b16 %v431, %v423
      %v568 = vpack.c.b16 %v432, %v424
      %v569 = vpack.c.b16 %v433, %v425
      %v570 = vpack.c.b16 %v442, %v434
      %v571 = vpack.c.b16 %v443, %v435
      %v572 = vpack.c.b16 %v444, %v436
      %v573 = vpack.c.b16 %v445, %v437
      %v574 = vpack.c.b16 %v446, %v438
      %v575 = vpack.c.b16 %v447, %v439
      %v576 = vpack.c.b16 %v448, %v440
      %v577 = vpack.c.b16 %v449, %v441
      %v578 = vpack.c.b16 %v458, %v450
      %v579 = vpack.c.b16 %v459, %v451
      %v580 = vpack.c.b16 %v460, %v452
      %v581 = vpack.c.b16 %v461, %v453
      %v582 = vpack.c.b16 %v462, %v454
      %v583 = vpack.c.b16 %v463, %v455
      %v584 = vpack.c.b16 %v464, %v456
      %v585 = vpack.c.b16 %v465, %v457
      %v586 = vpack.c.b16 %v474, %v466
      %v587 = vpack.c.b16 %v475, %v467
      %v588 = vpack.c.b16 %v476, %v468
      %v589 = vpack.c.b16 %v477, %v469
      %v590 = vpack.c.b16 %v478, %v470
      %v591 = vpack.c.b16 %v479, %v471
      %v592 = vpack.c.b16 %v480, %v472
      %v593 = vpack.c.b16 %v481, %v473
      %v594 = vpack.c.b16 %v490, %v482
      %v595 = vpack.c.b16 %v491, %v483
      %v596 = vpack.c.b16 %v492, %v484
      %v597 = vpack.c.b16 %v493, %v485
      %v598 = vpack.c.b16 %v494, %v486
      %v599 = vpack.c.b16 %v495, %v487
      %v600 = vpack.c.b16 %v496, %v488
      %v601 = vpack.c.b16 %v497, %v489
      %v602 = vpack.c.b16 %v506, %v498
      %v603 = vpack.c.b16 %v507, %v499
      %v604 = vpack.c.b16 %v508, %v500
      %v605 = vpack.c.b16 %v509, %v501
      %v606 = vpack.c.b16 %v510, %v502
      %v607 = vpack.c.b16 %v511, %v503
      %v608 = vpack.c.b16 %v512, %v504
      %v609 = vpack.c.b16 %v513, %v505
      %v610 = vpack.c.b16 %v522, %v514
      %v611 = vpack.c.b16 %v523, %v515
      %v612 = vpack.c.b16 %v524, %v516
      %v613 = vpack.c.b16 %v525, %v517
      %v614 = vpack.c.b16 %v526, %v518
      %v615 = vpack.c.b16 %v527, %v519
      %v616 = vpack.c.b16 %v528, %v520
      %v617 = vpack.c.b16 %v529, %v521
      %v618 = vpack.c.b16 %v538, %v530
      %v619 = vpack.c.b16 %v539, %v531
      %v620 = vpack.c.b16 %v540, %v532
      %v621 = vpack.c.b16 %v541, %v533
      %v622 = vpack.c.b16 %v542, %v534
      %v623 = vpack.c.b16 %v543, %v535
      %v624 = vpack.c.b16 %v544, %v536
      %v625 = vpack.c.b16 %v545, %v537
      %v626 = vpack.c.b16 %v554, %v546
      %v627 = vpack.c.b16 %v555, %v547
      %v628 = vpack.c.b16 %v556, %v548
      %v629 = vpack.c.b16 %v557, %v549
      %v630 = vpack.c.b16 %v558, %v550
      %v631 = vpack.c.b16 %v559, %v551
      %v632 = vpack.c.b16 %v560, %v552
      %v633 = vpack.c.b16 %v561, %v553
      %vm706 = vcmask 130048
      %v708 = vsel %vm706, %v344, 0
      %710 = vmatpush.bf16.msra.mxu0 %v618
      %711 = vmatpush.bf16.msra.mxu0 %v610
      %712 = vmatpush.bf16.msra.mxu0 %v602
      %713 = vmatpush.bf16.msra.mxu0 %v594
      %714 = vmatpush.bf16.msra.mxu0 %v586
      %715 = vmatpush.bf16.msra.mxu0 %v578
      %716 = vmatpush.bf16.msra.mxu0 %v570
      %717 = vmatpush.bf16.msra.mxu0 %v562
      %718 = vmatmul.bf16.gmra.mxu0 %v343
      %v719 = vpop.f32.mrf.mxu0
      %v720 = vadd.f32 %v330, %v719
      %v721 = vpop.f32.mrf.mxu0
      %v722 = vadd.f32 %v335, %v721
      %723 = vdwg.mxu0
      %724 = vmatpush.bf16.msra.mxu0 0
      %725 = vmatpush.bf16.msra.mxu0 0
      %726 = vmatpush.bf16.msra.mxu0 0
      %727 = vmatpush.bf16.msra.mxu0 0
      %728 = vmatpush.bf16.msra.mxu0 0
      %729 = vmatpush.bf16.msra.mxu0 0
      %730 = vmatpush.bf16.msra.mxu0 0
      %731 = vmatpush.bf16.msra.mxu0 %v626
      %732 = vmatmul.bf16.gmra.mxu0 %v708
      %v733 = vpop.f32.mrf.mxu0
      %v734 = vadd.f32 %v720, %v733
      %v735 = vpop.f32.mrf.mxu0
      %v736 = vadd.f32 %v722, %v735
      %737 = vdwg.mxu0
      %738 = vmatpush.bf16.msra.mxu0 %v619
      %739 = vmatpush.bf16.msra.mxu0 %v611
      %740 = vmatpush.bf16.msra.mxu0 %v603
      %741 = vmatpush.bf16.msra.mxu0 %v595
      %742 = vmatpush.bf16.msra.mxu0 %v587
      %743 = vmatpush.bf16.msra.mxu0 %v579
      %744 = vmatpush.bf16.msra.mxu0 %v571
      %745 = vmatpush.bf16.msra.mxu0 %v563
      %746 = vmatmul.bf16.gmra.mxu0 %v343
      %v747 = vpop.f32.mrf.mxu0
      %v748 = vadd.f32 %v330, %v747
      %v749 = vpop.f32.mrf.mxu0
      %v750 = vadd.f32 %v335, %v749
      %751 = vdwg.mxu0
      %752 = vmatpush.bf16.msra.mxu0 0
      %753 = vmatpush.bf16.msra.mxu0 0
      %754 = vmatpush.bf16.msra.mxu0 0
      %755 = vmatpush.bf16.msra.mxu0 0
      %756 = vmatpush.bf16.msra.mxu0 0
      %757 = vmatpush.bf16.msra.mxu0 0
      %758 = vmatpush.bf16.msra.mxu0 0
      %759 = vmatpush.bf16.msra.mxu0 %v627
      %760 = vmatmul.bf16.gmra.mxu0 %v708
      %v761 = vpop.f32.mrf.mxu0
      %v762 = vadd.f32 %v748, %v761
      %v763 = vpop.f32.mrf.mxu0
      %v764 = vadd.f32 %v750, %v763
      %765 = vdwg.mxu0
      %766 = vmatpush.bf16.msra.mxu0 %v620
      %767 = vmatpush.bf16.msra.mxu0 %v612
      %768 = vmatpush.bf16.msra.mxu0 %v604
      %769 = vmatpush.bf16.msra.mxu0 %v596
      %770 = vmatpush.bf16.msra.mxu0 %v588
      %771 = vmatpush.bf16.msra.mxu0 %v580
      %772 = vmatpush.bf16.msra.mxu0 %v572
      %773 = vmatpush.bf16.msra.mxu0 %v564
      %774 = vmatmul.bf16.gmra.mxu0 %v343
      %v775 = vpop.f32.mrf.mxu0
      %v776 = vadd.f32 %v330, %v775
      %v777 = vpop.f32.mrf.mxu0
      %v778 = vadd.f32 %v335, %v777
      %779 = vdwg.mxu0
      %780 = vmatpush.bf16.msra.mxu0 0
      %781 = vmatpush.bf16.msra.mxu0 0
      %782 = vmatpush.bf16.msra.mxu0 0
      %783 = vmatpush.bf16.msra.mxu0 0
      %784 = vmatpush.bf16.msra.mxu0 0
      %785 = vmatpush.bf16.msra.mxu0 0
      %786 = vmatpush.bf16.msra.mxu0 0
      %787 = vmatpush.bf16.msra.mxu0 %v628
      %788 = vmatmul.bf16.gmra.mxu0 %v708
      %v789 = vpop.f32.mrf.mxu0
      %v790 = vadd.f32 %v776, %v789
      %v791 = vpop.f32.mrf.mxu0
      %v792 = vadd.f32 %v778, %v791
      %793 = vdwg.mxu0
      %794 = vmatpush.bf16.msra.mxu0 %v621
      %795 = vmatpush.bf16.msra.mxu0 %v613
      %796 = vmatpush.bf16.msra.mxu0 %v605
      %797 = vmatpush.bf16.msra.mxu0 %v597
      %798 = vmatpush.bf16.msra.mxu0 %v589
      %799 = vmatpush.bf16.msra.mxu0 %v581
      %800 = vmatpush.bf16.msra.mxu0 %v573
      %801 = vmatpush.bf16.msra.mxu0 %v565
      %802 = vmatmul.bf16.gmra.mxu0 %v343
      %v803 = vpop.f32.mrf.mxu0
      %v804 = vadd.f32 %v330, %v803
      %v805 = vpop.f32.mrf.mxu0
      %v806 = vadd.f32 %v335, %v805
      %807 = vdwg.mxu0
      %808 = vmatpush.bf16.msra.mxu0 0
      %809 = vmatpush.bf16.msra.mxu0 0
      %810 = vmatpush.bf16.msra.mxu0 0
      %811 = vmatpush.bf16.msra.mxu0 0
      %812 = vmatpush.bf16.msra.mxu0 0
      %813 = vmatpush.bf16.msra.mxu0 0
      %814 = vmatpush.bf16.msra.mxu0 0
      %815 = vmatpush.bf16.msra.mxu0 %v629
      %816 = vmatmul.bf16.gmra.mxu0 %v708
      %v817 = vpop.f32.mrf.mxu0
      %v818 = vadd.f32 %v804, %v817
      %v819 = vpop.f32.mrf.mxu0
      %v820 = vadd.f32 %v806, %v819
      %821 = vdwg.mxu0
      %822 = vmatpush.bf16.msra.mxu0 %v622
      %823 = vmatpush.bf16.msra.mxu0 %v614
      %824 = vmatpush.bf16.msra.mxu0 %v606
      %825 = vmatpush.bf16.msra.mxu0 %v598
      %826 = vmatpush.bf16.msra.mxu0 %v590
      %827 = vmatpush.bf16.msra.mxu0 %v582
      %828 = vmatpush.bf16.msra.mxu0 %v574
      %829 = vmatpush.bf16.msra.mxu0 %v566
      %830 = vmatmul.bf16.gmra.mxu0 %v343
      %v831 = vpop.f32.mrf.mxu0
      %v832 = vadd.f32 %v330, %v831
      %v833 = vpop.f32.mrf.mxu0
      %v834 = vadd.f32 %v335, %v833
      %835 = vdwg.mxu0
      %836 = vmatpush.bf16.msra.mxu0 0
      %837 = vmatpush.bf16.msra.mxu0 0
      %838 = vmatpush.bf16.msra.mxu0 0
      %839 = vmatpush.bf16.msra.mxu0 0
      %840 = vmatpush.bf16.msra.mxu0 0
      %841 = vmatpush.bf16.msra.mxu0 0
      %842 = vmatpush.bf16.msra.mxu0 0
      %843 = vmatpush.bf16.msra.mxu0 %v630
      %844 = vmatmul.bf16.gmra.mxu0 %v708
      %v845 = vpop.f32.mrf.mxu0
      %v846 = vadd.f32 %v832, %v845
      %v847 = vpop.f32.mrf.mxu0
      %v848 = vadd.f32 %v834, %v847
      %849 = vdwg.mxu0
      %850 = vmatpush.bf16.msra.mxu0 %v623
      %851 = vmatpush.bf16.msra.mxu0 %v615
      %852 = vmatpush.bf16.msra.mxu0 %v607
      %853 = vmatpush.bf16.msra.mxu0 %v599
      %854 = vmatpush.bf16.msra.mxu0 %v591
      %855 = vmatpush.bf16.msra.mxu0 %v583
      %856 = vmatpush.bf16.msra.mxu0 %v575
      %857 = vmatpush.bf16.msra.mxu0 %v567
      %858 = vmatmul.bf16.gmra.mxu0 %v343
      %v859 = vpop.f32.mrf.mxu0
      %v860 = vadd.f32 %v330, %v859
      %v861 = vpop.f32.mrf.mxu0
      %v862 = vadd.f32 %v335, %v861
      %863 = vdwg.mxu0
      %864 = vmatpush.bf16.msra.mxu0 0
      %865 = vmatpush.bf16.msra.mxu0 0
      %866 = vmatpush.bf16.msra.mxu0 0
      %867 = vmatpush.bf16.msra.mxu0 0
      %868 = vmatpush.bf16.msra.mxu0 0
      %869 = vmatpush.bf16.msra.mxu0 0
      %870 = vmatpush.bf16.msra.mxu0 0
      %871 = vmatpush.bf16.msra.mxu0 %v631
      %872 = vmatmul.bf16.gmra.mxu0 %v708
      %v873 = vpop.f32.mrf.mxu0
      %v874 = vadd.f32 %v860, %v873
      %v875 = vpop.f32.mrf.mxu0
      %v876 = vadd.f32 %v862, %v875
      %877 = vdwg.mxu0
      %878 = vmatpush.bf16.msra.mxu0 %v624
      %879 = vmatpush.bf16.msra.mxu0 %v616
      %880 = vmatpush.bf16.msra.mxu0 %v608
      %881 = vmatpush.bf16.msra.mxu0 %v600
      %882 = vmatpush.bf16.msra.mxu0 %v592
      %883 = vmatpush.bf16.msra.mxu0 %v584
      %884 = vmatpush.bf16.msra.mxu0 %v576
      %885 = vmatpush.bf16.msra.mxu0 %v568
      %886 = vmatmul.bf16.gmra.mxu0 %v343
      %v887 = vpop.f32.mrf.mxu0
      %v888 = vadd.f32 %v330, %v887
      %v889 = vpop.f32.mrf.mxu0
      %v890 = vadd.f32 %v335, %v889
      %891 = vdwg.mxu0
      %892 = vmatpush.bf16.msra.mxu0 0
      %893 = vmatpush.bf16.msra.mxu0 0
      %894 = vmatpush.bf16.msra.mxu0 0
      %895 = vmatpush.bf16.msra.mxu0 0
      %896 = vmatpush.bf16.msra.mxu0 0
      %897 = vmatpush.bf16.msra.mxu0 0
      %898 = vmatpush.bf16.msra.mxu0 0
      %899 = vmatpush.bf16.msra.mxu0 %v632
      %900 = vmatmul.bf16.gmra.mxu0 %v708
      %v901 = vpop.f32.mrf.mxu0
      %v902 = vadd.f32 %v888, %v901
      %v903 = vpop.f32.mrf.mxu0
      %v904 = vadd.f32 %v890, %v903
      %905 = vdwg.mxu0
      %906 = vmatpush.bf16.msra.mxu0 %v625
      %907 = vmatpush.bf16.msra.mxu0 %v617
      %908 = vmatpush.bf16.msra.mxu0 %v609
      %909 = vmatpush.bf16.msra.mxu0 %v601
      %910 = vmatpush.bf16.msra.mxu0 %v593
      %911 = vmatpush.bf16.msra.mxu0 %v585
      %912 = vmatpush.bf16.msra.mxu0 %v577
      %913 = vmatpush.bf16.msra.mxu0 %v569
      %914 = vmatmul.bf16.gmra.mxu0 %v343
      %v915 = vpop.f32.mrf.mxu0
      %v916 = vadd.f32 %v330, %v915
      %v917 = vpop.f32.mrf.mxu0
      %v918 = vadd.f32 %v335, %v917
      %919 = vdwg.mxu0
      %920 = vmatpush.bf16.msra.mxu0 0
      %921 = vmatpush.bf16.msra.mxu0 0
      %922 = vmatpush.bf16.msra.mxu0 0
      %923 = vmatpush.bf16.msra.mxu0 0
      %924 = vmatpush.bf16.msra.mxu0 0
      %925 = vmatpush.bf16.msra.mxu0 0
      %926 = vmatpush.bf16.msra.mxu0 0
      %927 = vmatpush.bf16.msra.mxu0 %v633
      %928 = vmatmul.bf16.gmra.mxu0 %v708
      %v929 = vpop.f32.mrf.mxu0
      %v930 = vadd.f32 %v916, %v929
      %v931 = vpop.f32.mrf.mxu0
      %v932 = vadd.f32 %v918, %v931
      %933 = vdwg.mxu0
      %934 = vst [vmem:[%s239] sm:$0xff] %v734
      %935 = vst [vmem:[%s239 + $0x8] sm:$0xff] %v762
      %936 = vst [vmem:[%s239 + $0x10] sm:$0xff] %v790
      %937 = vst [vmem:[%s239 + $0x18] sm:$0xff] %v818
      %938 = vst [vmem:[%s239 + $0x20] sm:$0xff] %v846
      %939 = vst [vmem:[%s239 + $0x28] sm:$0xff] %v874
      %940 = vst [vmem:[%s239 + $0x30] sm:$0xff] %v902
      %941 = vst [vmem:[%s239 + $0x38] sm:$0xff] %v930
      %942 = vst [vmem:[%s239 + $0x40] sm:$0xff] %v736
      %943 = vst [vmem:[%s239 + $0x48] sm:$0xff] %v764
      %944 = vst [vmem:[%s239 + $0x50] sm:$0xff] %v792
      %945 = vst [vmem:[%s239 + $0x58] sm:$0xff] %v820
      %946 = vst [vmem:[%s239 + $0x60] sm:$0xff] %v848
      %947 = vst [vmem:[%s239 + $0x68] sm:$0xff] %v876
      %948 = vst [vmem:[%s239 + $0x70] sm:$0xff] %v904
      %949 = vst [vmem:[%s239 + $0x78] sm:$0xff] %v932
      %v950 = vadd.f32 %v734, %v762
      %v951 = vadd.f32 %v950, %v790
      %v952 = vadd.f32 %v951, %v818
      %v953 = vadd.f32 %v952, %v846
      %v954 = vadd.f32 %v953, %v874
      %v955 = vadd.f32 %v954, %v902
      %v956 = vadd.f32 %v955, %v930
      %957 = vadd.xlane.f32.xlu0 %v956
      %v958 = vpop.xlane.xlu0 %957
      %v959 = vadd.f32 %v736, %v764
      %v960 = vadd.f32 %v959, %v792
      %v961 = vadd.f32 %v960, %v820
      %v962 = vadd.f32 %v961, %v848
      %v963 = vadd.f32 %v962, %v876
      %v964 = vadd.f32 %v963, %v904
      %v965 = vadd.f32 %v964, %v932
      %966 = vadd.xlane.f32.xlu0 %v965
      %v967 = vpop.xlane.xlu0 %966
      %vm968 = vcmask 7168
      %969 = vst.msk [vmem:[%s244] sm:$0xff] %vm968, %v958
      %970 = vst.msk [vmem:[%s244 + $0x8] sm:$0xff] %vm968, %v967
      %v971 = vmul.f32 %v734, %v734
      %v972 = vmul.f32 %v762, %v762
      %v973 = vmul.f32 %v790, %v790
      %v974 = vmul.f32 %v818, %v818
      %v975 = vmul.f32 %v846, %v846
      %v976 = vmul.f32 %v874, %v874
      %v977 = vmul.f32 %v902, %v902
      %v978 = vmul.f32 %v930, %v930
      %v979 = vmul.f32 %v736, %v736
      %v980 = vmul.f32 %v764, %v764
      %v981 = vmul.f32 %v792, %v792
      %v982 = vmul.f32 %v820, %v820
      %v983 = vmul.f32 %v848, %v848
      %v984 = vmul.f32 %v876, %v876
      %v985 = vmul.f32 %v904, %v904
      %v986 = vmul.f32 %v932, %v932
      %v987 = vadd.f32 %v971, %v972
      %v988 = vadd.f32 %v987, %v973
      %v989 = vadd.f32 %v988, %v974
      %v990 = vadd.f32 %v989, %v975
      %v991 = vadd.f32 %v990, %v976
      %v992 = vadd.f32 %v991, %v977
      %v993 = vadd.f32 %v992, %v978
      %994 = vadd.xlane.f32.xlu0 %v993
      %v995 = vpop.xlane.xlu0 %994
      %v996 = vadd.f32 %v979, %v980
      %v997 = vadd.f32 %v996, %v981
      %v998 = vadd.f32 %v997, %v982
      %v999 = vadd.f32 %v998, %v983
      %v1000 = vadd.f32 %v999, %v984
      %v1001 = vadd.f32 %v1000, %v985
      %v1002 = vadd.f32 %v1001, %v986
      %1003 = vadd.xlane.f32.xlu0 %v1002
      %v1004 = vpop.xlane.xlu0 %1003
      %1005 = vst.msk [vmem:[%s249] sm:$0xff] %vm968, %v995
      %1006 = vst.msk [vmem:[%s249 + $0x8] sm:$0xff] %vm968, %v1004
      %p1007 = scmp.lt.s32.totalorder %s17, 1
      %s1008 = scalar_select %p1007, %s17, 1
      %s1009 = smul.addr %s1008, 16
      %s1010 = smul.addr %s1009, 8
      %s1011 = scalar_lea.vmem %s3, %s1010
      %p1012 = scmp.lt.s32.totalorder %s17, 1
      %s1013 = scalar_select %p1012, %s17, 1
      %s1014 = smul.addr %s1013, 2
      %s1015 = smul.addr %s1014, 8
      %s1016 = scalar_lea.vmem %s4, %s1015
      %p1017 = scmp.lt.s32.totalorder %s17, 1
      %s1018 = scalar_select %p1017, %s17, 1
      %s1019 = smul.addr %s1018, 2
      %s1020 = smul.addr %s1019, 8
      %s1021 = scalar_lea.vmem %s5, %s1020
      // Predicated region
      $region33: #{decoder_block_forward.6} parent=31 // pred_check
        %p1022 = pneg %p103
      $region34: #{decoder_block_forward.6} parent=31 // pred_check_branch
        %1024 = sbr.rel (%p1022) target = $region36
      $region35: #{decoder_block_forward.6} parent=31 // pred_region
        _
      $region36: #{decoder_block_forward.6} parent=31 // pred_fallthru
        _
      // Predicated region
      $region37: #{decoder_block_forward.6} parent=31 // pred_check
        %p1025 = pneg %p129
      $region38: #{decoder_block_forward.6} parent=31 // pred_check_branch
        %1027 = sbr.rel (%p1025) target = $region40
      $region39: #{decoder_block_forward.6} parent=31 // pred_region
        _
      $region40: #{decoder_block_forward.6} parent=31 // pred_fallthru
        _
      // Predicated region
      $region41: #{decoder_block_forward.6} parent=31 // pred_check
        %p1028 = pneg %p155
      $region42: #{decoder_block_forward.6} parent=31 // pred_check_branch
        %1030 = sbr.rel (%p1028) target = $region44
      $region43: #{decoder_block_forward.6} parent=31 // pred_region
        _
      $region44: #{decoder_block_forward.6} parent=31 // pred_fallthru
        _
    $region32: #{decoder_block_forward.6} parent=5 // pred_fallthru
      _
    %p1031 = scmp.le.s32.totalorder 2, %s12
    // Predicated region
    $region45: #{decoder_block_forward.6} parent=5 // pred_check
      %p1032 = pneg %p1031
    $region46: #{decoder_block_forward.6} parent=5 // pred_check_branch
      %1034 = sbr.rel (%p1032) target = $region48
    $region47: #{decoder_block_forward.6} parent=5 // pred_region
      %s1035 = ssub.s32 %s12, 2
      // Predicated region
      $region49: #{decoder_block_forward.6} parent=47 // pred_check
        %p1036 = pneg %p109
      $region50: #{decoder_block_forward.6} parent=47 // pred_check_branch
        %1038 = sbr.rel (%p1036) target = $region52
      $region51: #{decoder_block_forward.6} parent=47 // pred_region
        %p1039 = scmp.lt.s32.totalorder %s18, 1
        %s1040 = scalar_select %p1039, %s18, 1
        %s1041 = smul.addr %s1040, 16
        %s1042 = smul.addr %s1041, 8
        %s1043 = scalar_lea.vmem %s3, %s1042
      $region52: #{decoder_block_forward.6} parent=47 // pred_fallthru
        _
      // Predicated region
      $region53: #{decoder_block_forward.6} parent=47 // pred_check
        %p1044 = pneg %p135
      $region54: #{decoder_block_forward.6} parent=47 // pred_check_branch
        %1046 = sbr.rel (%p1044) target = $region56
      $region55: #{decoder_block_forward.6} parent=47 // pred_region
        %p1047 = scmp.lt.s32.totalorder %s18, 1
        %s1048 = scalar_select %p1047, %s18, 1
        %s1049 = smul.addr %s1048, 2
        %s1050 = smul.addr %s1049, 8
        %s1051 = scalar_lea.vmem %s4, %s1050
      $region56: #{decoder_block_forward.6} parent=47 // pred_fallthru
        _
      // Predicated region
      $region57: #{decoder_block_forward.6} parent=47 // pred_check
        %p1052 = pneg %p161
      $region58: #{decoder_block_forward.6} parent=47 // pred_check_branch
        %1054 = sbr.rel (%p1052) target = $region60
      $region59: #{decoder_block_forward.6} parent=47 // pred_region
        %p1055 = scmp.lt.s32.totalorder %s18, 1
        %s1056 = scalar_select %p1055, %s18, 1
        %s1057 = smul.addr %s1056, 2
        %s1058 = smul.addr %s1057, 8
        %s1059 = scalar_lea.vmem %s5, %s1058
      $region60: #{decoder_block_forward.6} parent=47 // pred_fallthru
        _
    $region48: #{decoder_block_forward.6} parent=5 // pred_fallthru
      _
  $region6: #{decoder_block_forward.6} parent=0 // loop_footer
    %s16 = sadd.s32 1, %s12
  $region7: #{decoder_block_forward.6} parent=0 // loop_footer_branch
    %11 = sbr.rel target = $region3
  $region8: #{decoder_block_forward.6} parent=0 // loop_exit
    _

</llo_original>
